<compile_context>
chip_gen: v7x
topology: tpu7x:2x2x1
jax: 0.10.0
libtpu: 0.0.40
codegen_flags: <defaults>
</compile_context>

<pallas_src>
import functools

import jax
import jax.numpy as jnp
from jax.experimental import pallas as pl
from jax.experimental.pallas import tpu as pltpu

EPS = 1e-12  # torch F.normalize default eps


def _round_up(x, m):
    return ((x + m - 1) // m) * m


def _hete_attention_kernel(x_ref, z_ref, bmat_ref, dmat_ref, o_ref, *,
                           n_iter, k_pack, compute_dtype, approx_recip):
    f32 = jnp.float32
    tm, fd = x_ref.shape            # fd = n_facet * emb_dim (lane-dense)
    G = bmat_ref.shape[0]           # k_pack * fd (packed group lane width)
    n_grp = z_ref.shape[1] // G     # neighbor_size / k_pack

    bmat = bmat_ref[...]            # (G, G) 0/1 facet-block-diagonal matrix
    dmat = dmat_ref[...]            # (G, G) (1/emb_dim) k-slice-block matrix
    mxu_dtype = bmat.dtype
    bmat_f = bmat[:fd, :fd]         # facet block for width-fd operands (x, u)

    def seg_sum(v, m):
        # Per-facet (emb_dim lane-block) sums, already lane-broadcast, as one
        # MXU matmul against a constant 0/1 block matrix (keeps segmented
        # reductions off the VALU/XLU).
        return jnp.dot(v.astype(mxu_dtype), m, preferred_element_type=f32)

    def inv_facet_norm(v, m):
        # torch F.normalize scale: 1 / max(||v_facet||, eps), lane-broadcast.
        # Clamp + rsqrt kept in f32: EPS**2 = 1e-24 would flush to 0 in bf16.
        return jax.lax.rsqrt(jnp.maximum(seg_sum(v * v, m), EPS * EPS))

    # --- normalize x (f32; it is the residual added every iteration) -------
    x = x_ref[...].astype(f32)
    xn = x * inv_facet_norm(x, bmat_f)                        # (tm, fd)

    # --- normalize z, k_pack slices at a time; keep zn in compute_dtype ----
    zn = []
    for g in range(n_grp):
        zg = z_ref[:, g * G:(g + 1) * G].astype(f32)          # (tm, G)
        zn.append((zg * inv_facet_norm(zg, bmat)).astype(compute_dtype))

    u = xn
    for it in range(n_iter):
        u_c = u.astype(compute_dtype)
        u_rep = jnp.concatenate([u_c] * k_pack, axis=-1) if k_pack > 1 else u_c
        acc = xn                                              # u_new = sum_k zn*w + xn
        for g in range(n_grp):
            zg = zn[g]
            # Logits p[m, k, f] = <zn_kf, u_f>, lane-broadcast over emb_dim.
            # Both vectors are (re)normalized before every logit computation,
            # so |p| <= ~1 and no max-subtraction is needed before exp.
            p = seg_sum(zg * u_rep, bmat)                     # (tm, G) f32
            e = jnp.exp(p.astype(compute_dtype))              # bf16 EUP on v6e/v7x
            # Softmax denominator per (k, facet) via MXU (ones/emb_dim block
            # matrix) -> arrives lane-broadcast; replaces the XLU lane-reduce.
            denom = seg_sum(e, dmat)                          # (tm, G) f32
            w = e * pl.reciprocal(denom, approx=approx_recip).astype(compute_dtype)
            zw = (zg * w).astype(f32)                         # (tm, G)
            for j in range(k_pack):                           # sum over the pack
                acc = acc + zw[:, j * fd:(j + 1) * fd]
        u = acc
        if it < n_iter - 1:
            u = u * inv_facet_norm(u, bmat_f)

    o_ref[...] = u.astype(o_ref.dtype)


def hete_attention(features, metapath_features, *, emb_dim, n_facet, n_iter,
                   row_tile=1024, stream_dtype=jnp.bfloat16,
                   compute_dtype=jnp.bfloat16, mxu_dtype=jnp.bfloat16,
                   approx_recip=True, k_pack=2,
                   vmem_limit_bytes=32 * 1024 * 1024):
    """features: (B, N, F*D); metapath_features: (B, N, K, F*D) -> (B, N, F*D).

    Defaults target v6e/v7x (bf16 stream/compute/MXU, k-pair packed matmuls).
    For exact parity with the PyTorch forward use stream_dtype=None,
    compute_dtype=mxu_dtype=jnp.float32, approx_recip=False.  On v5e prefer
    k_pack=1 (its 128x128 MXUs already match the unpacked shape).
    """
    B_, N, fd_in = features.shape
    K = metapath_features.shape[2]
    F, D = n_facet, emb_dim
    FD = F * D
    assert fd_in == FD and metapath_features.shape[3] == FD
    assert FD % 128 == 0, "n_facet*emb_dim must be a multiple of 128 lanes"

    k_pack = max(int(k_pack), 1)
    if K % k_pack != 0:
        k_pack = 1
    G = k_pack * FD

    M = B_ * N
    out_dtype = features.dtype

    # Lane-dense layouts (free reshapes of the incoming tensors).
    x = features.reshape(M, FD)
    z = metapath_features.reshape(M, K * FD)
    if stream_dtype is not None:
        x = x.astype(stream_dtype)
        z = z.astype(stream_dtype)

    # Row tiling: big tiles amortize the ~0.35us per-grid-step overhead, but
    # cap the tile so the grid has >=2 steps whenever possible (v7x has 2
    # TensorCores; a single-step grid would idle one of them).
    tm = max(8, min(row_tile, _round_up(pl.cdiv(M, 2), 8)))
    m_pad = _round_up(M, tm)
    if m_pad != M:
        # Zero rows normalize to zero vectors and are sliced off afterwards.
        x = jnp.pad(x, ((0, m_pad - M), (0, 0)))
        z = jnp.pad(z, ((0, m_pad - M), (0, 0)))

    # Constant block matrices (DMA'd to VMEM, reused every grid step):
    #  * bmat: 0/1 facet-block-diagonal -> per-facet segmented sums on the MXU.
    #  * dmat: (1/emb_dim) within each k-slice of the pack -> softmax
    #    denominators on the MXU, already lane-broadcast.
    lane = jnp.arange(G, dtype=jnp.int32)
    facet_id = lane // D
    k_id = lane // FD
    bmat = (facet_id[:, None] == facet_id[None, :]).astype(mxu_dtype)
    dmat = ((k_id[:, None] == k_id[None, :]).astype(jnp.float32) / D).astype(mxu_dtype)

    grid = (m_pad // tm,)
    kernel = functools.partial(_hete_attention_kernel, n_iter=n_iter,
                               k_pack=k_pack, compute_dtype=compute_dtype,
                               approx_recip=approx_recip)

    out = pl.pallas_call(
        kernel,
        out_shape=jax.ShapeDtypeStruct((m_pad, FD), out_dtype),
        grid_spec=pltpu.PrefetchScalarGridSpec(
            num_scalar_prefetch=0,
            grid=grid,
            in_specs=[
                pl.BlockSpec((tm, FD), lambda i: (i, 0)),
                pl.BlockSpec((tm, K * FD), lambda i: (i, 0)),
                pl.BlockSpec((G, G), lambda i: (0, 0)),
                pl.BlockSpec((G, G), lambda i: (0, 0)),
            ],
            out_specs=pl.BlockSpec((tm, FD), lambda i: (i, 0)),
        ),
        compiler_params=pltpu.CompilerParams(
            dimension_semantics=("parallel",),
            vmem_limit_bytes=vmem_limit_bytes),
    )(x, z, bmat, dmat)

    if m_pad != M:
        out = out[:M]
    return out.reshape(B_, N, FD)


def hete_attention_ref(features, metapath_features, *, emb_dim, n_facet, n_iter):
    """Pure-JAX reference mirroring the PyTorch forward (f32 throughout)."""
    def l2n(v, axis):
        nrm = jnp.sqrt(jnp.sum(v * v, axis=axis, keepdims=True))
        return v / jnp.maximum(nrm, EPS)

    B_, N, _ = features.shape
    K = metapath_features.shape[2]
    F, D = n_facet, emb_dim
    x = features.reshape(B_, N, F, D)
    z = metapath_features.reshape(B_, N, K, F, D)
    x = l2n(x, axis=3)
    z = l2n(z, axis=4)
    u = x
    for clus_iter in range(n_iter):
        p = jnp.sum(z * u[:, :, None, :, :], axis=4)
        p = jax.nn.softmax(p, axis=3)
        u = jnp.sum(z * p[..., None], axis=2)
        u = u + x
        if clus_iter < n_iter - 1:
            u = l2n(u, axis=3)
    return u.reshape(B_, N, F * D)


if __name__ == "__main__":
    D, F, n_iter = 32, 4, 3
    B, N, K = 2, 8, 4

    key = jax.random.PRNGKey(0)
    k1, k2, k3, k4 = jax.random.split(key, 4)
    feats = jax.random.normal(k1, (B, N, F * D), dtype=jnp.float32)
    mp = jax.random.normal(k2, (B, N, K, F * D), dtype=jnp.float32)
    ref = hete_attention_ref(feats, mp, emb_dim=D, n_facet=F, n_iter=n_iter)

    # 1) Precise configuration (f32 stream/compute/MXU, exact reciprocal,
    #    unpacked k): pins the algorithm against the PyTorch-equivalent ref.
    out = jax.block_until_ready(hete_attention(
        feats, mp, emb_dim=D, n_facet=F, n_iter=n_iter,
        stream_dtype=None, compute_dtype=jnp.float32, mxu_dtype=jnp.float32,
        approx_recip=False, k_pack=1))
    assert out.shape == ref.shape == (B, N, F * D)
    assert jnp.allclose(out, ref, atol=1e-4, rtol=1e-4), "precise path mismatch"

    # 2) Precise math but k-pair-packed (256-wide) MXU path.
    out = jax.block_until_ready(hete_attention(
        feats, mp, emb_dim=D, n_facet=F, n_iter=n_iter,
        stream_dtype=None, compute_dtype=jnp.float32, mxu_dtype=jnp.float32,
        approx_recip=False, k_pack=2))
    assert jnp.allclose(out, ref, atol=1e-4, rtol=1e-4), "k-packed precise path mismatch"

    # 3) Default fast path (bf16 stream/compute/MXU, approx EUP reciprocal,
    #    k_pack=2).  Tolerance reflects mixed precision only; correctness of
    #    the math is established by tests 1-2 above.
    out = jax.block_until_ready(hete_attention(
        feats, mp, emb_dim=D, n_facet=F, n_iter=n_iter))
    assert jnp.allclose(out.astype(jnp.float32), ref, atol=6e-2, rtol=6e-2), \
        "fast path mismatch"

    # 4) Multi-tile grid + row-padding path (M=600 not a multiple of the tile).
    feats2 = jax.random.normal(k3, (2, 300, F * D), dtype=jnp.float32)
    mp2 = jax.random.normal(k4, (2, 300, K, F * D), dtype=jnp.float32)
    ref2 = hete_attention_ref(feats2, mp2, emb_dim=D, n_facet=F, n_iter=n_iter)
    out2 = jax.block_until_ready(hete_attention(
        feats2, mp2, emb_dim=D, n_facet=F, n_iter=n_iter))
    assert jnp.allclose(out2.astype(jnp.float32), ref2, atol=6e-2, rtol=6e-2), \
        "padded multi-tile mismatch"

    print("KERNEL_OK")
</pallas_src>

<mosaic_0001>
module attributes {stable_mosaic.version = 11 : i64} {
  func.func @_hete_attention_kernel(%arg0: i32, %arg1: memref<8x128xf32, #tpu.memory_space<vmem>>, %arg2: memref<8x512xf32, #tpu.memory_space<vmem>>, %arg3: memref<128x128xf32, #tpu.memory_space<vmem>>, %arg4: memref<128x128xf32, #tpu.memory_space<vmem>>, %arg5: memref<8x128xf32, #tpu.memory_space<vmem>>) attributes {dimension_semantics = [#tpu.dimension_semantics<parallel>], iteration_bounds = array<i64: 2>, scalar_prefetch = 0 : i64, scratch_operands = 0 : i64, tpu.core_type = #tpu.core_type<tc>, window_params = [{transform_indices = @transform_0, window_bounds = array<i64: 8, 128>}, {transform_indices = @transform_1, window_bounds = array<i64: 8, 512>}, {pipeline_mode = #tpu.pipeline_mode<synchronous>, transform_indices = @transform_2, window_bounds = array<i64: 128, 128>}, {pipeline_mode = #tpu.pipeline_mode<synchronous>, transform_indices = @transform_3, window_bounds = array<i64: 128, 128>}, {transform_indices = @transform_4, window_bounds = array<i64: 8, 128>}]} {
    %c0 = arith.constant 0 : index
    %c0_0 = arith.constant 0 : index
    %0 = vector.load %arg3[%c0, %c0_0] : memref<128x128xf32, #tpu.memory_space<vmem>>, vector<128x128xf32>
    %c0_1 = arith.constant 0 : index
    %c0_2 = arith.constant 0 : index
    %1 = vector.load %arg4[%c0_1, %c0_2] : memref<128x128xf32, #tpu.memory_space<vmem>>, vector<128x128xf32>
    %c0_3 = arith.constant 0 : index
    %c0_4 = arith.constant 0 : index
    %2 = vector.load %arg1[%c0_3, %c0_4] : memref<8x128xf32, #tpu.memory_space<vmem>>, vector<8x128xf32>
    %3 = arith.mulf %2, %2 : vector<8x128xf32>
    %cst = arith.constant dense<0.000000e+00> : vector<8x128xf32>
    %4 = tpu.matmul %3, %0, %cst {dimension_numbers = #tpu.dot_dimension_numbers<[1], [0], [0], [1], [0, 0, 1, 1], [], []>} : vector<8x128xf32>, vector<128x128xf32>, vector<8x128xf32> -> vector<8x128xf32>
    %cst_5 = arith.constant 1.000000e-24 : f32
    %5 = vector.broadcast %cst_5 : f32 to vector<8x128xf32>
    %6 = arith.maximumf %4, %5 : vector<8x128xf32>
    %7 = math.rsqrt %6 : vector<8x128xf32>
    %8 = arith.mulf %2, %7 : vector<8x128xf32>
    %c0_6 = arith.constant 0 : index
    %c0_7 = arith.constant 0 : index
    %9 = vector.load %arg2[%c0_6, %c0_7] : memref<8x512xf32, #tpu.memory_space<vmem>>, vector<8x128xf32>
    %10 = arith.mulf %9, %9 : vector<8x128xf32>
    %cst_8 = arith.constant dense<0.000000e+00> : vector<8x128xf32>
    %11 = tpu.matmul %10, %0, %cst_8 {dimension_numbers = #tpu.dot_dimension_numbers<[1], [0], [0], [1], [0, 0, 1, 1], [], []>} : vector<8x128xf32>, vector<128x128xf32>, vector<8x128xf32> -> vector<8x128xf32>
    %cst_9 = arith.constant 1.000000e-24 : f32
    %12 = vector.broadcast %cst_9 : f32 to vector<8x128xf32>
    %13 = arith.maximumf %11, %12 : vector<8x128xf32>
    %14 = math.rsqrt %13 : vector<8x128xf32>
    %15 = arith.mulf %9, %14 : vector<8x128xf32>
    %c0_10 = arith.constant 0 : index
    %c128 = arith.constant 128 : index
    %16 = vector.load %arg2[%c0_10, %c128] : memref<8x512xf32, #tpu.memory_space<vmem>>, vector<8x128xf32>
    %17 = arith.mulf %16, %16 : vector<8x128xf32>
    %cst_11 = arith.constant dense<0.000000e+00> : vector<8x128xf32>
    %18 = tpu.matmul %17, %0, %cst_11 {dimension_numbers = #tpu.dot_dimension_numbers<[1], [0], [0], [1], [0, 0, 1, 1], [], []>} : vector<8x128xf32>, vector<128x128xf32>, vector<8x128xf32> -> vector<8x128xf32>
    %cst_12 = arith.constant 1.000000e-24 : f32
    %19 = vector.broadcast %cst_12 : f32 to vector<8x128xf32>
    %20 = arith.maximumf %18, %19 : vector<8x128xf32>
    %21 = math.rsqrt %20 : vector<8x128xf32>
    %22 = arith.mulf %16, %21 : vector<8x128xf32>
    %c0_13 = arith.constant 0 : index
    %c256 = arith.constant 256 : index
    %23 = vector.load %arg2[%c0_13, %c256] : memref<8x512xf32, #tpu.memory_space<vmem>>, vector<8x128xf32>
    %24 = arith.mulf %23, %23 : vector<8x128xf32>
    %cst_14 = arith.constant dense<0.000000e+00> : vector<8x128xf32>
    %25 = tpu.matmul %24, %0, %cst_14 {dimension_numbers = #tpu.dot_dimension_numbers<[1], [0], [0], [1], [0, 0, 1, 1], [], []>} : vector<8x128xf32>, vector<128x128xf32>, vector<8x128xf32> -> vector<8x128xf32>
    %cst_15 = arith.constant 1.000000e-24 : f32
    %26 = vector.broadcast %cst_15 : f32 to vector<8x128xf32>
    %27 = arith.maximumf %25, %26 : vector<8x128xf32>
    %28 = math.rsqrt %27 : vector<8x128xf32>
    %29 = arith.mulf %23, %28 : vector<8x128xf32>
    %c0_16 = arith.constant 0 : index
    %c384 = arith.constant 384 : index
    %30 = vector.load %arg2[%c0_16, %c384] : memref<8x512xf32, #tpu.memory_space<vmem>>, vector<8x128xf32>
    %31 = arith.mulf %30, %30 : vector<8x128xf32>
    %cst_17 = arith.constant dense<0.000000e+00> : vector<8x128xf32>
    %32 = tpu.matmul %31, %0, %cst_17 {dimension_numbers = #tpu.dot_dimension_numbers<[1], [0], [0], [1], [0, 0, 1, 1], [], []>} : vector<8x128xf32>, vector<128x128xf32>, vector<8x128xf32> -> vector<8x128xf32>
    %cst_18 = arith.constant 1.000000e-24 : f32
    %33 = vector.broadcast %cst_18 : f32 to vector<8x128xf32>
    %34 = arith.maximumf %32, %33 : vector<8x128xf32>
    %35 = math.rsqrt %34 : vector<8x128xf32>
    %36 = arith.mulf %30, %35 : vector<8x128xf32>
    %37 = arith.mulf %15, %8 : vector<8x128xf32>
    %cst_19 = arith.constant dense<0.000000e+00> : vector<8x128xf32>
    %38 = tpu.matmul %37, %0, %cst_19 {dimension_numbers = #tpu.dot_dimension_numbers<[1], [0], [0], [1], [0, 0, 1, 1], [], []>} : vector<8x128xf32>, vector<128x128xf32>, vector<8x128xf32> -> vector<8x128xf32>
    %39 = math.exp %38 : vector<8x128xf32>
    %cst_20 = arith.constant dense<0.000000e+00> : vector<8x128xf32>
    %40 = tpu.matmul %39, %1, %cst_20 {dimension_numbers = #tpu.dot_dimension_numbers<[1], [0], [0], [1], [0, 0, 1, 1], [], []>} : vector<8x128xf32>, vector<128x128xf32>, vector<8x128xf32> -> vector<8x128xf32>
    %41 = tpu.reciprocal %40 : vector<8x128xf32> -> vector<8x128xf32>
    %42 = arith.mulf %39, %41 : vector<8x128xf32>
    %43 = arith.mulf %15, %42 : vector<8x128xf32>
    %44 = arith.addf %8, %43 : vector<8x128xf32>
    %45 = arith.mulf %22, %8 : vector<8x128xf32>
    %cst_21 = arith.constant dense<0.000000e+00> : vector<8x128xf32>
    %46 = tpu.matmul %45, %0, %cst_21 {dimension_numbers = #tpu.dot_dimension_numbers<[1], [0], [0], [1], [0, 0, 1, 1], [], []>} : vector<8x128xf32>, vector<128x128xf32>, vector<8x128xf32> -> vector<8x128xf32>
    %47 = math.exp %46 : vector<8x128xf32>
    %cst_22 = arith.constant dense<0.000000e+00> : vector<8x128xf32>
    %48 = tpu.matmul %47, %1, %cst_22 {dimension_numbers = #tpu.dot_dimension_numbers<[1], [0], [0], [1], [0, 0, 1, 1], [], []>} : vector<8x128xf32>, vector<128x128xf32>, vector<8x128xf32> -> vector<8x128xf32>
    %49 = tpu.reciprocal %48 : vector<8x128xf32> -> vector<8x128xf32>
    %50 = arith.mulf %47, %49 : vector<8x128xf32>
    %51 = arith.mulf %22, %50 : vector<8x128xf32>
    %52 = arith.addf %44, %51 : vector<8x128xf32>
    %53 = arith.mulf %29, %8 : vector<8x128xf32>
    %cst_23 = arith.constant dense<0.000000e+00> : vector<8x128xf32>
    %54 = tpu.matmul %53, %0, %cst_23 {dimension_numbers = #tpu.dot_dimension_numbers<[1], [0], [0], [1], [0, 0, 1, 1], [], []>} : vector<8x128xf32>, vector<128x128xf32>, vector<8x128xf32> -> vector<8x128xf32>
    %55 = math.exp %54 : vector<8x128xf32>
    %cst_24 = arith.constant dense<0.000000e+00> : vector<8x128xf32>
    %56 = tpu.matmul %55, %1, %cst_24 {dimension_numbers = #tpu.dot_dimension_numbers<[1], [0], [0], [1], [0, 0, 1, 1], [], []>} : vector<8x128xf32>, vector<128x128xf32>, vector<8x128xf32> -> vector<8x128xf32>
    %57 = tpu.reciprocal %56 : vector<8x128xf32> -> vector<8x128xf32>
    %58 = arith.mulf %55, %57 : vector<8x128xf32>
    %59 = arith.mulf %29, %58 : vector<8x128xf32>
    %60 = arith.addf %52, %59 : vector<8x128xf32>
    %61 = arith.mulf %36, %8 : vector<8x128xf32>
    %cst_25 = arith.constant dense<0.000000e+00> : vector<8x128xf32>
    %62 = tpu.matmul %61, %0, %cst_25 {dimension_numbers = #tpu.dot_dimension_numbers<[1], [0], [0], [1], [0, 0, 1, 1], [], []>} : vector<8x128xf32>, vector<128x128xf32>, vector<8x128xf32> -> vector<8x128xf32>
    %63 = math.exp %62 : vector<8x128xf32>
    %cst_26 = arith.constant dense<0.000000e+00> : vector<8x128xf32>
    %64 = tpu.matmul %63, %1, %cst_26 {dimension_numbers = #tpu.dot_dimension_numbers<[1], [0], [0], [1], [0, 0, 1, 1], [], []>} : vector<8x128xf32>, vector<128x128xf32>, vector<8x128xf32> -> vector<8x128xf32>
    %65 = tpu.reciprocal %64 : vector<8x128xf32> -> vector<8x128xf32>
    %66 = arith.mulf %63, %65 : vector<8x128xf32>
    %67 = arith.mulf %36, %66 : vector<8x128xf32>
    %68 = arith.addf %60, %67 : vector<8x128xf32>
    %69 = arith.mulf %68, %68 : vector<8x128xf32>
    %cst_27 = arith.constant dense<0.000000e+00> : vector<8x128xf32>
    %70 = tpu.matmul %69, %0, %cst_27 {dimension_numbers = #tpu.dot_dimension_numbers<[1], [0], [0], [1], [0, 0, 1, 1], [], []>} : vector<8x128xf32>, vector<128x128xf32>, vector<8x128xf32> -> vector<8x128xf32>
    %cst_28 = arith.constant 1.000000e-24 : f32
    %71 = vector.broadcast %cst_28 : f32 to vector<8x128xf32>
    %72 = arith.maximumf %70, %71 : vector<8x128xf32>
    %73 = math.rsqrt %72 : vector<8x128xf32>
    %74 = arith.mulf %68, %73 : vector<8x128xf32>
    %75 = arith.mulf %15, %74 : vector<8x128xf32>
    %cst_29 = arith.constant dense<0.000000e+00> : vector<8x128xf32>
    %76 = tpu.matmul %75, %0, %cst_29 {dimension_numbers = #tpu.dot_dimension_numbers<[1], [0], [0], [1], [0, 0, 1, 1], [], []>} : vector<8x128xf32>, vector<128x128xf32>, vector<8x128xf32> -> vector<8x128xf32>
    %77 = math.exp %76 : vector<8x128xf32>
    %cst_30 = arith.constant dense<0.000000e+00> : vector<8x128xf32>
    %78 = tpu.matmul %77, %1, %cst_30 {dimension_numbers = #tpu.dot_dimension_numbers<[1], [0], [0], [1], [0, 0, 1, 1], [], []>} : vector<8x128xf32>, vector<128x128xf32>, vector<8x128xf32> -> vector<8x128xf32>
    %79 = tpu.reciprocal %78 : vector<8x128xf32> -> vector<8x128xf32>
    %80 = arith.mulf %77, %79 : vector<8x128xf32>
    %81 = arith.mulf %15, %80 : vector<8x128xf32>
    %82 = arith.addf %8, %81 : vector<8x128xf32>
    %83 = arith.mulf %22, %74 : vector<8x128xf32>
    %cst_31 = arith.constant dense<0.000000e+00> : vector<8x128xf32>
    %84 = tpu.matmul %83, %0, %cst_31 {dimension_numbers = #tpu.dot_dimension_numbers<[1], [0], [0], [1], [0, 0, 1, 1], [], []>} : vector<8x128xf32>, vector<128x128xf32>, vector<8x128xf32> -> vector<8x128xf32>
    %85 = math.exp %84 : vector<8x128xf32>
    %cst_32 = arith.constant dense<0.000000e+00> : vector<8x128xf32>
    %86 = tpu.matmul %85, %1, %cst_32 {dimension_numbers = #tpu.dot_dimension_numbers<[1], [0], [0], [1], [0, 0, 1, 1], [], []>} : vector<8x128xf32>, vector<128x128xf32>, vector<8x128xf32> -> vector<8x128xf32>
    %87 = tpu.reciprocal %86 : vector<8x128xf32> -> vector<8x128xf32>
    %88 = arith.mulf %85, %87 : vector<8x128xf32>
    %89 = arith.mulf %22, %88 : vector<8x128xf32>
    %90 = arith.addf %82, %89 : vector<8x128xf32>
    %91 = arith.mulf %29, %74 : vector<8x128xf32>
    %cst_33 = arith.constant dense<0.000000e+00> : vector<8x128xf32>
    %92 = tpu.matmul %91, %0, %cst_33 {dimension_numbers = #tpu.dot_dimension_numbers<[1], [0], [0], [1], [0, 0, 1, 1], [], []>} : vector<8x128xf32>, vector<128x128xf32>, vector<8x128xf32> -> vector<8x128xf32>
    %93 = math.exp %92 : vector<8x128xf32>
    %cst_34 = arith.constant dense<0.000000e+00> : vector<8x128xf32>
    %94 = tpu.matmul %93, %1, %cst_34 {dimension_numbers = #tpu.dot_dimension_numbers<[1], [0], [0], [1], [0, 0, 1, 1], [], []>} : vector<8x128xf32>, vector<128x128xf32>, vector<8x128xf32> -> vector<8x128xf32>
    %95 = tpu.reciprocal %94 : vector<8x128xf32> -> vector<8x128xf32>
    %96 = arith.mulf %93, %95 : vector<8x128xf32>
    %97 = arith.mulf %29, %96 : vector<8x128xf32>
    %98 = arith.addf %90, %97 : vector<8x128xf32>
    %99 = arith.mulf %36, %74 : vector<8x128xf32>
    %cst_35 = arith.constant dense<0.000000e+00> : vector<8x128xf32>
    %100 = tpu.matmul %99, %0, %cst_35 {dimension_numbers = #tpu.dot_dimension_numbers<[1], [0], [0], [1], [0, 0, 1, 1], [], []>} : vector<8x128xf32>, vector<128x128xf32>, vector<8x128xf32> -> vector<8x128xf32>
    %101 = math.exp %100 : vector<8x128xf32>
    %cst_36 = arith.constant dense<0.000000e+00> : vector<8x128xf32>
    %102 = tpu.matmul %101, %1, %cst_36 {dimension_numbers = #tpu.dot_dimension_numbers<[1], [0], [0], [1], [0, 0, 1, 1], [], []>} : vector<8x128xf32>, vector<128x128xf32>, vector<8x128xf32> -> vector<8x128xf32>
    %103 = tpu.reciprocal %102 : vector<8x128xf32> -> vector<8x128xf32>
    %104 = arith.mulf %101, %103 : vector<8x128xf32>
    %105 = arith.mulf %36, %104 : vector<8x128xf32>
    %106 = arith.addf %98, %105 : vector<8x128xf32>
    %107 = arith.mulf %106, %106 : vector<8x128xf32>
    %cst_37 = arith.constant dense<0.000000e+00> : vector<8x128xf32>
    %108 = tpu.matmul %107, %0, %cst_37 {dimension_numbers = #tpu.dot_dimension_numbers<[1], [0], [0], [1], [0, 0, 1, 1], [], []>} : vector<8x128xf32>, vector<128x128xf32>, vector<8x128xf32> -> vector<8x128xf32>
    %cst_38 = arith.constant 1.000000e-24 : f32
    %109 = vector.broadcast %cst_38 : f32 to vector<8x128xf32>
    %110 = arith.maximumf %108, %109 : vector<8x128xf32>
    %111 = math.rsqrt %110 : vector<8x128xf32>
    %112 = arith.mulf %106, %111 : vector<8x128xf32>
    %113 = arith.mulf %15, %112 : vector<8x128xf32>
    %cst_39 = arith.constant dense<0.000000e+00> : vector<8x128xf32>
    %114 = tpu.matmul %113, %0, %cst_39 {dimension_numbers = #tpu.dot_dimension_numbers<[1], [0], [0], [1], [0, 0, 1, 1], [], []>} : vector<8x128xf32>, vector<128x128xf32>, vector<8x128xf32> -> vector<8x128xf32>
    %115 = math.exp %114 : vector<8x128xf32>
    %cst_40 = arith.constant dense<0.000000e+00> : vector<8x128xf32>
    %116 = tpu.matmul %115, %1, %cst_40 {dimension_numbers = #tpu.dot_dimension_numbers<[1], [0], [0], [1], [0, 0, 1, 1], [], []>} : vector<8x128xf32>, vector<128x128xf32>, vector<8x128xf32> -> vector<8x128xf32>
    %117 = tpu.reciprocal %116 : vector<8x128xf32> -> vector<8x128xf32>
    %118 = arith.mulf %115, %117 : vector<8x128xf32>
    %119 = arith.mulf %15, %118 : vector<8x128xf32>
    %120 = arith.addf %8, %119 : vector<8x128xf32>
    %121 = arith.mulf %22, %112 : vector<8x128xf32>
    %cst_41 = arith.constant dense<0.000000e+00> : vector<8x128xf32>
    %122 = tpu.matmul %121, %0, %cst_41 {dimension_numbers = #tpu.dot_dimension_numbers<[1], [0], [0], [1], [0, 0, 1, 1], [], []>} : vector<8x128xf32>, vector<128x128xf32>, vector<8x128xf32> -> vector<8x128xf32>
    %123 = math.exp %122 : vector<8x128xf32>
    %cst_42 = arith.constant dense<0.000000e+00> : vector<8x128xf32>
    %124 = tpu.matmul %123, %1, %cst_42 {dimension_numbers = #tpu.dot_dimension_numbers<[1], [0], [0], [1], [0, 0, 1, 1], [], []>} : vector<8x128xf32>, vector<128x128xf32>, vector<8x128xf32> -> vector<8x128xf32>
    %125 = tpu.reciprocal %124 : vector<8x128xf32> -> vector<8x128xf32>
    %126 = arith.mulf %123, %125 : vector<8x128xf32>
    %127 = arith.mulf %22, %126 : vector<8x128xf32>
    %128 = arith.addf %120, %127 : vector<8x128xf32>
    %129 = arith.mulf %29, %112 : vector<8x128xf32>
    %cst_43 = arith.constant dense<0.000000e+00> : vector<8x128xf32>
    %130 = tpu.matmul %129, %0, %cst_43 {dimension_numbers = #tpu.dot_dimension_numbers<[1], [0], [0], [1], [0, 0, 1, 1], [], []>} : vector<8x128xf32>, vector<128x128xf32>, vector<8x128xf32> -> vector<8x128xf32>
    %131 = math.exp %130 : vector<8x128xf32>
    %cst_44 = arith.constant dense<0.000000e+00> : vector<8x128xf32>
    %132 = tpu.matmul %131, %1, %cst_44 {dimension_numbers = #tpu.dot_dimension_numbers<[1], [0], [0], [1], [0, 0, 1, 1], [], []>} : vector<8x128xf32>, vector<128x128xf32>, vector<8x128xf32> -> vector<8x128xf32>
    %133 = tpu.reciprocal %132 : vector<8x128xf32> -> vector<8x128xf32>
    %134 = arith.mulf %131, %133 : vector<8x128xf32>
    %135 = arith.mulf %29, %134 : vector<8x128xf32>
    %136 = arith.addf %128, %135 : vector<8x128xf32>
    %137 = arith.mulf %36, %112 : vector<8x128xf32>
    %cst_45 = arith.constant dense<0.000000e+00> : vector<8x128xf32>
    %138 = tpu.matmul %137, %0, %cst_45 {dimension_numbers = #tpu.dot_dimension_numbers<[1], [0], [0], [1], [0, 0, 1, 1], [], []>} : vector<8x128xf32>, vector<128x128xf32>, vector<8x128xf32> -> vector<8x128xf32>
    %139 = math.exp %138 : vector<8x128xf32>
    %cst_46 = arith.constant dense<0.000000e+00> : vector<8x128xf32>
    %140 = tpu.matmul %139, %1, %cst_46 {dimension_numbers = #tpu.dot_dimension_numbers<[1], [0], [0], [1], [0, 0, 1, 1], [], []>} : vector<8x128xf32>, vector<128x128xf32>, vector<8x128xf32> -> vector<8x128xf32>
    %141 = tpu.reciprocal %140 : vector<8x128xf32> -> vector<8x128xf32>
    %142 = arith.mulf %139, %141 : vector<8x128xf32>
    %143 = arith.mulf %36, %142 : vector<8x128xf32>
    %144 = arith.addf %136, %143 : vector<8x128xf32>
    %c0_47 = arith.constant 0 : index
    %c0_48 = arith.constant 0 : index
    %145 = vector.load %arg5[%c0_47, %c0_48] : memref<8x128xf32, #tpu.memory_space<vmem>>, vector<8x128xf32>
    tpu.vector_store %arg5[%c0_47, %c0_48], %144 {strides = array<i32>} : memref<8x128xf32, #tpu.memory_space<vmem>>, vector<8x128xf32>,
    return
  }
  func.func @transform_0(%arg0: i32) -> (i32, i32) {
    %c0_i32 = arith.constant 0 : i32
    %c0_i32_0 = arith.constant 0 : i32
    return %arg0, %c0_i32 : i32, i32
  }
  func.func @transform_1(%arg0: i32) -> (i32, i32) {
    %c0_i32 = arith.constant 0 : i32
    %c0_i32_0 = arith.constant 0 : i32
    return %arg0, %c0_i32 : i32, i32
  }
  func.func @transform_2(%arg0: i32) -> (i32, i32) {
    %c0_i32 = arith.constant 0 : i32
    %c0_i32_0 = arith.constant 0 : i32
    %c0_i32_1 = arith.constant 0 : i32
    return %c0_i32, %c0_i32_0 : i32, i32
  }
  func.func @transform_3(%arg0: i32) -> (i32, i32) {
    %c0_i32 = arith.constant 0 : i32
    %c0_i32_0 = arith.constant 0 : i32
    %c0_i32_1 = arith.constant 0 : i32
    return %c0_i32, %c0_i32_0 : i32, i32
  }
  func.func @transform_4(%arg0: i32) -> (i32, i32) {
    %c0_i32 = arith.constant 0 : i32
    %c0_i32_0 = arith.constant 0 : i32
    return %arg0, %c0_i32 : i32, i32
  }
}

</mosaic_0001>

<llo_original>
// kernel: tpu_custom_call.1
$region0: #{tpu_custom_call.1}
  #allocation0 [shape = 'u32[]', space=smem, size = 0x4, offset = 0x4, fixed_abs, tag = 'smem constant byte address 0x4 - core index']
  #allocation1 [shape = 'u32[144,128]{1,0:T(1,128)}', space=vmem, size = 0x12000, scoped, tag = 'internal scratch']
  %s0 = inlined_call_operand.hbm [shape: f32[16,128], index: 0, kind: input, shape index: {}]
  %s1 = inlined_call_operand.hbm [shape: f32[16,512], index: 1, kind: input, shape index: {}]
  %s2 = inlined_call_operand.hbm [shape: f32[128,128], index: 2, kind: input, shape index: {}]
  %s3 = inlined_call_operand.hbm [shape: f32[128,128], index: 3, kind: input, shape index: {}]
  %s4 = inlined_call_operand.hbm [shape: f32[16,128], index: 4, kind: output, shape index: {}]
  %s5 = sld [smem:[#allocation0]]
  $region65: #{tpu_custom_call.1} parent=0
    _
  %s7 = ssub.s32 1, %s5
  %s8 = scalar_select 0, %s7, %s5
  $region1: #{tpu_custom_call.1} parent=0
    #allocation2 [shape = 'u8[8192]{0}', space=vmem, size = 0x2000, scoped, tag = 'input window, operand 0']
    #allocation3 [shape = 's32[2]{0}', space=sflag, size = 0x8, scoped, tag = 'scoped memory for tpu_custom_call.1']
    #allocation4 [shape = 's32[2]{0}', space=sflag, size = 0x8, scoped, tag = 'scoped memory for tpu_custom_call.1']
    #allocation5 [shape = 'u8[32768]{0}', space=vmem, size = 0x8000, scoped, tag = 'input window, operand 1']
    #allocation6 [shape = 's32[2]{0}', space=sflag, size = 0x8, scoped, tag = 'scoped memory for tpu_custom_call.1']
    #allocation7 [shape = 'u8[65536]{0}', space=vmem, size = 0x10000, scoped, tag = 'input window, operand 2, single buffered']
    #allocation8 [shape = 'u8[65536]{0}', space=vmem, size = 0x10000, scoped, tag = 'input window, operand 3, single buffered']
    #allocation9 [shape = 's32[1]{0}', space=sflag, size = 0x4, scoped, tag = 'scoped memory for tpu_custom_call.1']
    #allocation10 [shape = 'u8[8192]{0}', space=vmem, size = 0x2000, scoped, tag = 'output window, operand 0']
    %9 = vsyncpa [#allocation3], 0
    %s10 = scalar_lea.sflag [#allocation3], 1
    %11 = vsyncpa %s10, 0
    %12 = vsyncpa [#allocation6], 0
    %s13 = scalar_lea.sflag [#allocation6], 1
    %14 = vsyncpa %s13, 0
    %15 = vsyncpa [#allocation9], 0
    %16 = vsyncpa [#allocation4], 0
    %s17 = scalar_lea.sflag [#allocation4], 1
    %18 = vsyncpa %s17, 0
    loop: start=0, step=1, limit=4
    $region2: #{tpu_custom_call.1} parent=1 // loop_pre_header
      _
    $region3: #{tpu_custom_call.1} parent=1 // loop_header
      %s20 = sphi 0, %s24
      %p21 = scmp.ge.s32.totalorder %s20, 4
      %s30 = sphi 0, %s32
      %s33 = sphi 0, %s30
      %s34 = sphi 0, %s33
      %s50 = sphi 0, %s34
      %s56 = sphi 0, %s58
      %s59 = sphi 0, %s56
      %s60 = sphi 0, %s59
      %s76 = sphi 0, %s60
      %s80 = sphi 0, %s80
      %s82 = sphi 0, %s80
      %s83 = sphi 0, %s82
      %s97 = sphi 0, %s83
      %s101 = sphi 0, %s101
      %s103 = sphi 0, %s101
      %s104 = sphi 0, %s103
      %s118 = sphi 0, %s104
      %s124 = sphi 0, %s126
      %s127 = sphi 0, %s124
      %s128 = sphi 0, %s127
      %s144 = sphi 0, %s128
    $region4: #{tpu_custom_call.1} parent=1 // loop_header_branch
      %23 = sbr.rel (%p21) target = $region8
    $region5: #{tpu_custom_call.1} parent=1 // loop_body
      %s25 = ssub.s32 %s20, 1
      %s26 = ssub.s32 %s20, 2
      %s27 = sadd.s32 %s20, 1
      %s28 = ssub.s32 %s20, %s27
      %p29 = scmp.eq.s32.totalorder %s28, 0
      %s31 = sadd.s32 %s30, 1
      %s32 = scalar_select %p29, %s30, %s31
      %p35 = pneg %p29
      %p36 = scmp.eq.s32.totalorder %s20, 1
      %p37 = por %p35, %p36
      %p38 = scmp.ne.s32.totalorder %s30, %s33
      %p39 = scmp.eq.s32.totalorder %s20, 0
      %p40 = por %p38, %p39
      %p41 = scmp.ne.s32.totalorder %s30, %s33
      %p42 = scmp.eq.s32.totalorder %s25, 1
      %p43 = por %p41, %p42
      %p44 = scmp.ne.s32.totalorder %s33, %s34
      %p45 = scmp.eq.s32.totalorder %s25, 0
      %p46 = por %p44, %p45
      %p47 = scmp.ne.s32.totalorder %s33, %s34
      %p48 = scmp.eq.s32.totalorder %s26, 1
      %p49 = por %p47, %p48
      %p51 = scmp.ne.s32.totalorder %s34, %s50
      %p52 = scmp.eq.s32.totalorder %s26, 0
      %p53 = por %p51, %p52
      %s54 = ssub.s32 %s20, %s27
      %p55 = scmp.eq.s32.totalorder %s54, 0
      %s57 = sadd.s32 %s56, 1
      %s58 = scalar_select %p55, %s56, %s57
      %p61 = pneg %p55
      %p62 = scmp.eq.s32.totalorder %s20, 1
      %p63 = por %p61, %p62
      %p64 = scmp.ne.s32.totalorder %s56, %s59
      %p65 = scmp.eq.s32.totalorder %s20, 0
      %p66 = por %p64, %p65
      %p67 = scmp.ne.s32.totalorder %s56, %s59
      %p68 = scmp.eq.s32.totalorder %s25, 1
      %p69 = por %p67, %p68
      %p70 = scmp.ne.s32.totalorder %s59, %s60
      %p71 = scmp.eq.s32.totalorder %s25, 0
      %p72 = por %p70, %p71
      %p73 = scmp.ne.s32.totalorder %s59, %s60
      %p74 = scmp.eq.s32.totalorder %s26, 1
      %p75 = por %p73, %p74
      %p77 = scmp.ne.s32.totalorder %s60, %s76
      %p78 = scmp.eq.s32.totalorder %s26, 0
      %p79 = por %p77, %p78
      %s81 = sadd.s32 %s80, 1
      %p84 = scmp.eq.s32.totalorder %s20, 1
      %p85 = scmp.ne.s32.totalorder %s80, %s82
      %p86 = scmp.eq.s32.totalorder %s20, 0
      %p87 = por %p85, %p86
      %p88 = scmp.ne.s32.totalorder %s80, %s82
      %p89 = scmp.eq.s32.totalorder %s25, 1
      %p90 = por %p88, %p89
      %p91 = scmp.ne.s32.totalorder %s82, %s83
      %p92 = scmp.eq.s32.totalorder %s25, 0
      %p93 = por %p91, %p92
      %p94 = scmp.ne.s32.totalorder %s82, %s83
      %p95 = scmp.eq.s32.totalorder %s26, 1
      %p96 = por %p94, %p95
      %p98 = scmp.ne.s32.totalorder %s83, %s97
      %p99 = scmp.eq.s32.totalorder %s26, 0
      %p100 = por %p98, %p99
      %s102 = sadd.s32 %s101, 1
      %p105 = scmp.eq.s32.totalorder %s20, 1
      %p106 = scmp.ne.s32.totalorder %s101, %s103
      %p107 = scmp.eq.s32.totalorder %s20, 0
      %p108 = por %p106, %p107
      %p109 = scmp.ne.s32.totalorder %s101, %s103
      %p110 = scmp.eq.s32.totalorder %s25, 1
      %p111 = por %p109, %p110
      %p112 = scmp.ne.s32.totalorder %s103, %s104
      %p113 = scmp.eq.s32.totalorder %s25, 0
      %p114 = por %p112, %p113
      %p115 = scmp.ne.s32.totalorder %s103, %s104
      %p116 = scmp.eq.s32.totalorder %s26, 1
      %p117 = por %p115, %p116
      %p119 = scmp.ne.s32.totalorder %s104, %s118
      %p120 = scmp.eq.s32.totalorder %s26, 0
      %p121 = por %p119, %p120
      %s122 = ssub.s32 %s20, %s27
      %p123 = scmp.eq.s32.totalorder %s122, 0
      %s125 = sadd.s32 %s124, 1
      %s126 = scalar_select %p123, %s124, %s125
      %p129 = pneg %p123
      %p130 = scmp.eq.s32.totalorder %s20, 1
      %p131 = por %p129, %p130
      %p132 = scmp.ne.s32.totalorder %s124, %s127
      %p133 = scmp.eq.s32.totalorder %s20, 0
      %p134 = por %p132, %p133
      %p135 = scmp.ne.s32.totalorder %s124, %s127
      %p136 = scmp.eq.s32.totalorder %s25, 1
      %p137 = por %p135, %p136
      %p138 = scmp.ne.s32.totalorder %s127, %s128
      %p139 = scmp.eq.s32.totalorder %s25, 0
      %p140 = por %p138, %p139
      %p141 = scmp.ne.s32.totalorder %s127, %s128
      %p142 = scmp.eq.s32.totalorder %s26, 1
      %p143 = por %p141, %p142
      %p145 = scmp.ne.s32.totalorder %s128, %s144
      %p146 = scmp.eq.s32.totalorder %s26, 0
      %p147 = por %p145, %p146
      %p148 = scmp.le.s32.totalorder 1, %s20
      %p149 = scmp.lt.s32.totalorder %s20, 3
      %p150 = pnand %p148, %p149
      %p151 = pneg %p150
      // Predicated region
      $region9: #{tpu_custom_call.1} parent=5 // pred_check
        _
      $region10: #{tpu_custom_call.1} parent=5 // pred_check_branch
        %153 = sbr.rel (%p150) target = $region12
      $region11: #{tpu_custom_call.1} parent=5 // pred_region
        %s154 = ssub.s32 %s20, 1
        // Predicated region
        $region13: #{tpu_custom_call.1} parent=11 // pred_check
          %p155 = pneg %p93
        $region14: #{tpu_custom_call.1} parent=11 // pred_check_branch
          %157 = sbr.rel (%p155) target = $region16
        $region15: #{tpu_custom_call.1} parent=11 // pred_region
          %s159 = ssub.s32 2048, 2048
          %160 = vsyncadd [#allocation6], %s159
          %s161 = sshll.u32 [#allocation7], 4
          %s162 = int_to_ptr.vmem [resolvable:$true] %s161
          %167 = dma.hbm_to_vmem [thread:$0]  %s2, 2048, %s162, [#allocation6], 128, 128, 8
        $region16: #{tpu_custom_call.1} parent=11 // pred_fallthru
          _
        // Predicated region
        $region17: #{tpu_custom_call.1} parent=11 // pred_check
          %p168 = pneg %p114
        $region18: #{tpu_custom_call.1} parent=11 // pred_check_branch
          %170 = sbr.rel (%p168) target = $region20
        $region19: #{tpu_custom_call.1} parent=11 // pred_region
          %s172 = ssub.s32 2048, 2048
          %173 = vsyncadd [#allocation9], %s172
          %s174 = sshll.u32 [#allocation8], 4
          %s175 = int_to_ptr.vmem [resolvable:$true] %s174
          %180 = dma.hbm_to_vmem [thread:$0]  %s3, 2048, %s175, [#allocation9], 128, 128, 8
        $region20: #{tpu_custom_call.1} parent=11 // pred_fallthru
          _
      $region12: #{tpu_custom_call.1} parent=5 // pred_fallthru
        _
      %p181 = scmp.lt.s32.totalorder %s20, 2
      // Predicated region
      $region21: #{tpu_custom_call.1} parent=5 // pred_check
        %p182 = pneg %p181
      $region22: #{tpu_custom_call.1} parent=5 // pred_check_branch
        %184 = sbr.rel (%p182) target = $region24
      $region23: #{tpu_custom_call.1} parent=5 // pred_region
        // Predicated region
        $region25: #{tpu_custom_call.1} parent=23 // pred_check
          %p185 = pneg %p40
        $region26: #{tpu_custom_call.1} parent=23 // pred_check_branch
          %187 = sbr.rel (%p185) target = $region28
        $region27: #{tpu_custom_call.1} parent=23 // pred_region
          %s188 = sand.u32 %s30, 1
          %s189 = scalar_lea.sflag [#allocation3], %s188
          %s190 = sand.u32 %s30, 1
          %s191 = smul.addr %s190, 8
          %s192 = scalar_lea.vmem [#allocation2], %s191
          %s194 = ssub.s32 128, 128
          %195 = vsyncadd %s189, %s194
          %s196 = smul.addr %s20, 128
          %s197 = scalar_lea.hbm %s0, %s196
          %s199 = sshll.u32 %s192, 4
          %s200 = int_to_ptr.vmem [resolvable:$true] %s199
          %202 = dma.hbm_to_vmem [thread:$0]  %s197, 128, %s200, %s189
        $region28: #{tpu_custom_call.1} parent=23 // pred_fallthru
          _
        // Predicated region
        $region29: #{tpu_custom_call.1} parent=23 // pred_check
          %p203 = pneg %p66
        $region30: #{tpu_custom_call.1} parent=23 // pred_check_branch
          %205 = sbr.rel (%p203) target = $region32
        $region31: #{tpu_custom_call.1} parent=23 // pred_region
          %s206 = sand.u32 %s20, 1
          %s207 = scalar_lea.sflag [#allocation6], %s206
          %s208 = sand.u32 %s56, 1
          %s209 = smul.addr %s208, 32
          %s210 = scalar_lea.vmem [#allocation5], %s209
          %s212 = ssub.s32 512, 512
          %213 = vsyncadd %s207, %s212
          %s214 = smul.addr %s20, 4
          %s215 = smul.addr %s214, 128
          %s216 = scalar_lea.hbm %s1, %s215
          %s218 = sshll.u32 %s210, 4
          %s219 = int_to_ptr.vmem [resolvable:$true] %s218
          %221 = dma.hbm_to_vmem [thread:$0]  %s216, 512, %s219, %s207
        $region32: #{tpu_custom_call.1} parent=23 // pred_fallthru
          _
      $region24: #{tpu_custom_call.1} parent=5 // pred_fallthru
        _
      %p222 = scmp.le.s32.totalorder 1, %s20
      %p223 = scmp.lt.s32.totalorder %s20, 3
      %p224 = pnand %p222, %p223
      %p225 = pneg %p224
      // Predicated region
      $region33: #{tpu_custom_call.1} parent=5 // pred_check
        _
      $region34: #{tpu_custom_call.1} parent=5 // pred_check_branch
        %227 = sbr.rel (%p224) target = $region36
      $region35: #{tpu_custom_call.1} parent=5 // pred_region
        %s228 = ssub.s32 %s20, 1
        %s229 = sand.u32 %s33, 1
        %s230 = scalar_lea.sflag [#allocation3], %s229
        %s231 = sand.u32 %s33, 1
        %s232 = smul.addr %s231, 8
        %s233 = scalar_lea.vmem [#allocation2], %s232
        // Predicated region
        $region37: #{tpu_custom_call.1} parent=35 // pred_check
          %p234 = pneg %p46
        $region38: #{tpu_custom_call.1} parent=35 // pred_check_branch
          %236 = sbr.rel (%p234) target = $region40
        $region39: #{tpu_custom_call.1} parent=35 // pred_region
          %237 = dma.done %s230, 128
        $region40: #{tpu_custom_call.1} parent=35 // pred_fallthru
          _
        %s238 = sand.u32 %s25, 1
        %s239 = scalar_lea.sflag [#allocation6], %s238
        %s240 = sand.u32 %s59, 1
        %s241 = smul.addr %s240, 32
        %s242 = scalar_lea.vmem [#allocation5], %s241
        // Predicated region
        $region41: #{tpu_custom_call.1} parent=35 // pred_check
          %p243 = pneg %p72
        $region42: #{tpu_custom_call.1} parent=35 // pred_check_branch
          %245 = sbr.rel (%p243) target = $region44
        $region43: #{tpu_custom_call.1} parent=35 // pred_region
          %246 = dma.done %s239, 512
        $region44: #{tpu_custom_call.1} parent=35 // pred_fallthru
          _
        // Predicated region
        $region45: #{tpu_custom_call.1} parent=35 // pred_check
          %p247 = pneg %p93
        $region46: #{tpu_custom_call.1} parent=35 // pred_check_branch
          %249 = sbr.rel (%p247) target = $region48
        $region47: #{tpu_custom_call.1} parent=35 // pred_region
          %250 = dma.done [#allocation6], 2048
        $region48: #{tpu_custom_call.1} parent=35 // pred_fallthru
          _
        // Predicated region
        $region49: #{tpu_custom_call.1} parent=35 // pred_check
          %p251 = pneg %p114
        $region50: #{tpu_custom_call.1} parent=35 // pred_check_branch
          %253 = sbr.rel (%p251) target = $region52
        $region51: #{tpu_custom_call.1} parent=35 // pred_region
          %254 = dma.done [#allocation9], 2048
        $region52: #{tpu_custom_call.1} parent=35 // pred_fallthru
          _
        %s255 = sand.u32 %s33, 1
        %s256 = scalar_lea.sflag [#allocation3], %s255
        %s257 = sand.u32 %s33, 1
        %s258 = smul.addr %s257, 8
        %s259 = scalar_lea.vmem [#allocation2], %s258
        %p260 = pneg %p46
        %p261 = pneg %p43
        %s262 = sand.u32 %s25, 1
        %s263 = scalar_lea.sflag [#allocation6], %s262
        %s264 = sand.u32 %s59, 1
        %s265 = smul.addr %s264, 32
        %s266 = scalar_lea.vmem [#allocation5], %s265
        %p267 = pneg %p72
        %p268 = pneg %p69
        %p269 = pneg %p93
        %p270 = pneg %p90
        %p271 = pneg %p114
        %p272 = pneg %p111
        %p273 = pneg %p140
        %p274 = pneg %p137
        %s275 = sand.u32 %s127, 1
        %s276 = scalar_lea.sflag [#allocation4], %s275
        %s277 = sand.u32 %s127, 1
        %s278 = smul.addr %s277, 8
        %s279 = scalar_lea.vmem [#allocation10], %s278
        %v280 = vld [vmem:[#allocation7] sm:$0xff]
        %v281 = vld [vmem:[#allocation7 + $0x8] sm:$0xff]
        %v282 = vld [vmem:[#allocation7 + $0x10] sm:$0xff]
        %v283 = vld [vmem:[#allocation7 + $0x18] sm:$0xff]
        %v284 = vld [vmem:[#allocation7 + $0x20] sm:$0xff]
        %v285 = vld [vmem:[#allocation7 + $0x28] sm:$0xff]
        %v286 = vld [vmem:[#allocation7 + $0x30] sm:$0xff]
        %v287 = vld [vmem:[#allocation7 + $0x38] sm:$0xff]
        %v288 = vld [vmem:[#allocation7 + $0x40] sm:$0xff]
        %v289 = vld [vmem:[#allocation7 + $0x48] sm:$0xff]
        %v290 = vld [vmem:[#allocation7 + $0x50] sm:$0xff]
        %v291 = vld [vmem:[#allocation7 + $0x58] sm:$0xff]
        %v292 = vld [vmem:[#allocation7 + $0x60] sm:$0xff]
        %v293 = vld [vmem:[#allocation7 + $0x68] sm:$0xff]
        %v294 = vld [vmem:[#allocation7 + $0x70] sm:$0xff]
        %v295 = vld [vmem:[#allocation7 + $0x78] sm:$0xff]
        %v296 = vld [vmem:[#allocation8] sm:$0xff]
        %v297 = vld [vmem:[#allocation8 + $0x8] sm:$0xff]
        %v298 = vld [vmem:[#allocation8 + $0x10] sm:$0xff]
        %v299 = vld [vmem:[#allocation8 + $0x18] sm:$0xff]
        %v300 = vld [vmem:[#allocation8 + $0x20] sm:$0xff]
        %v301 = vld [vmem:[#allocation8 + $0x28] sm:$0xff]
        %v302 = vld [vmem:[#allocation8 + $0x30] sm:$0xff]
        %v303 = vld [vmem:[#allocation8 + $0x38] sm:$0xff]
        %v304 = vld [vmem:[#allocation8 + $0x40] sm:$0xff]
        %v305 = vld [vmem:[#allocation8 + $0x48] sm:$0xff]
        %v306 = vld [vmem:[#allocation8 + $0x50] sm:$0xff]
        %v307 = vld [vmem:[#allocation8 + $0x58] sm:$0xff]
        %v308 = vld [vmem:[#allocation8 + $0x60] sm:$0xff]
        %v309 = vld [vmem:[#allocation8 + $0x68] sm:$0xff]
        %v310 = vld [vmem:[#allocation8 + $0x70] sm:$0xff]
        %v311 = vld [vmem:[#allocation8 + $0x78] sm:$0xff]
        %v312 = vld [vmem:[%s233] sm:$0xff]
        %v313 = vmul.f32 %v312, %v312
        %314 = vmatprep.subr.mxu0 0.0
        %315 = vmatpush1.msra.mxu0 %v280
        %316 = vmatprep.subr.mxu0 0.0
        %317 = vmatpush1.msra.mxu0 %v281
        %318 = vmatprep.subr.mxu0 0.0
        %319 = vmatpush1.msra.mxu0 %v282
        %320 = vmatprep.subr.mxu0 0.0
        %321 = vmatpush1.msra.mxu0 %v283
        %322 = vmatprep.subr.mxu0 0.0
        %323 = vmatpush1.msra.mxu0 %v284
        %324 = vmatprep.subr.mxu0 0.0
        %325 = vmatpush1.msra.mxu0 %v285
        %326 = vmatprep.subr.mxu0 0.0
        %327 = vmatpush1.msra.mxu0 %v286
        %328 = vmatprep.subr.mxu0 0.0
        %329 = vmatpush1.msra.mxu0 %v287
        %330 = vmatprep.subr.mxu0 0.0
        %331 = vmatpush1.msra.mxu0 %v288
        %332 = vmatprep.subr.mxu0 0.0
        %333 = vmatpush1.msra.mxu0 %v289
        %334 = vmatprep.subr.mxu0 0.0
        %335 = vmatpush1.msra.mxu0 %v290
        %336 = vmatprep.subr.mxu0 0.0
        %337 = vmatpush1.msra.mxu0 %v291
        %338 = vmatprep.subr.mxu0 0.0
        %339 = vmatpush1.msra.mxu0 %v292
        %340 = vmatprep.subr.mxu0 0.0
        %341 = vmatpush1.msra.mxu0 %v293
        %342 = vmatprep.subr.mxu0 0.0
        %343 = vmatpush1.msra.mxu0 %v294
        %344 = vmatprep.subr.mxu0 0.0
        %345 = vmatpush1.msra.mxu0 %v295
        %346 = vmatprep.subr.mxu0 0.0
        %347 = vmatpush1.msra.mxu0 0.0
        %348 = vmatprep.subr.mxu0 0.0
        %349 = vmatpush1.msra.mxu0 0.0
        %350 = vmatprep.subr.mxu0 0.0
        %351 = vmatpush1.msra.mxu0 0.0
        %352 = vmatprep.subr.mxu0 0.0
        %353 = vmatpush1.msra.mxu0 0.0
        %354 = vmatprep.subr.mxu0 0.0
        %355 = vmatpush1.msra.mxu0 0.0
        %356 = vmatprep.subr.mxu0 0.0
        %357 = vmatpush1.msra.mxu0 0.0
        %358 = vmatprep.subr.mxu0 0.0
        %359 = vmatpush1.msra.mxu0 0.0
        %360 = vmatprep.subr.mxu0 0.0
        %361 = vmatpush1.msra.mxu0 0.0
        %362 = vmatprep.subr.mxu0 0.0
        %363 = vmatpush1.msra.mxu0 0.0
        %364 = vmatprep.subr.mxu0 0.0
        %365 = vmatpush1.msra.mxu0 0.0
        %366 = vmatprep.subr.mxu0 0.0
        %367 = vmatpush1.msra.mxu0 0.0
        %368 = vmatprep.subr.mxu0 0.0
        %369 = vmatpush1.msra.mxu0 0.0
        %370 = vmatprep.subr.mxu0 0.0
        %371 = vmatpush1.msra.mxu0 0.0
        %372 = vmatprep.subr.mxu0 0.0
        %373 = vmatpush1.msra.mxu0 0.0
        %374 = vmatprep.subr.mxu0 0.0
        %375 = vmatpush1.msra.mxu0 0.0
        %376 = vmatprep.subr.mxu0 0.0
        %377 = vmatpush1.msra.mxu0 0.0
        %378 = vmatprep.mubr.f32.mxu0 0.0
        %379 = vmatmul.mubr.f32.gmra.mrb[0].mxu0 %v313
        %v380 = vpop.f32.mrb[0].mxu0
        %v381 = vadd.f32 0.0, %v380
        %v382 = vpop.f32.mrb[0].mxu0
        %383 = vdwg.mxu0
        %v384 = vmax.f32 %v381, 1e-24
        %v385 = vrsqrt.pop %v384
        %v386 = vmul.f32 %v312, %v385
        %v387 = vld [vmem:[%s242] sm:$0xff]
        %v388 = vmul.f32 %v387, %v387
        %389 = vmatprep.subr.mxu0 0.0
        %390 = vmatpush1.msra.mxu0 %v280
        %391 = vmatprep.subr.mxu0 0.0
        %392 = vmatpush1.msra.mxu0 %v281
        %393 = vmatprep.subr.mxu0 0.0
        %394 = vmatpush1.msra.mxu0 %v282
        %395 = vmatprep.subr.mxu0 0.0
        %396 = vmatpush1.msra.mxu0 %v283
        %397 = vmatprep.subr.mxu0 0.0
        %398 = vmatpush1.msra.mxu0 %v284
        %399 = vmatprep.subr.mxu0 0.0
        %400 = vmatpush1.msra.mxu0 %v285
        %401 = vmatprep.subr.mxu0 0.0
        %402 = vmatpush1.msra.mxu0 %v286
        %403 = vmatprep.subr.mxu0 0.0
        %404 = vmatpush1.msra.mxu0 %v287
        %405 = vmatprep.subr.mxu0 0.0
        %406 = vmatpush1.msra.mxu0 %v288
        %407 = vmatprep.subr.mxu0 0.0
        %408 = vmatpush1.msra.mxu0 %v289
        %409 = vmatprep.subr.mxu0 0.0
        %410 = vmatpush1.msra.mxu0 %v290
        %411 = vmatprep.subr.mxu0 0.0
        %412 = vmatpush1.msra.mxu0 %v291
        %413 = vmatprep.subr.mxu0 0.0
        %414 = vmatpush1.msra.mxu0 %v292
        %415 = vmatprep.subr.mxu0 0.0
        %416 = vmatpush1.msra.mxu0 %v293
        %417 = vmatprep.subr.mxu0 0.0
        %418 = vmatpush1.msra.mxu0 %v294
        %419 = vmatprep.subr.mxu0 0.0
        %420 = vmatpush1.msra.mxu0 %v295
        %421 = vmatprep.subr.mxu0 0.0
        %422 = vmatpush1.msra.mxu0 0.0
        %423 = vmatprep.subr.mxu0 0.0
        %424 = vmatpush1.msra.mxu0 0.0
        %425 = vmatprep.subr.mxu0 0.0
        %426 = vmatpush1.msra.mxu0 0.0
        %427 = vmatprep.subr.mxu0 0.0
        %428 = vmatpush1.msra.mxu0 0.0
        %429 = vmatprep.subr.mxu0 0.0
        %430 = vmatpush1.msra.mxu0 0.0
        %431 = vmatprep.subr.mxu0 0.0
        %432 = vmatpush1.msra.mxu0 0.0
        %433 = vmatprep.subr.mxu0 0.0
        %434 = vmatpush1.msra.mxu0 0.0
        %435 = vmatprep.subr.mxu0 0.0
        %436 = vmatpush1.msra.mxu0 0.0
        %437 = vmatprep.subr.mxu0 0.0
        %438 = vmatpush1.msra.mxu0 0.0
        %439 = vmatprep.subr.mxu0 0.0
        %440 = vmatpush1.msra.mxu0 0.0
        %441 = vmatprep.subr.mxu0 0.0
        %442 = vmatpush1.msra.mxu0 0.0
        %443 = vmatprep.subr.mxu0 0.0
        %444 = vmatpush1.msra.mxu0 0.0
        %445 = vmatprep.subr.mxu0 0.0
        %446 = vmatpush1.msra.mxu0 0.0
        %447 = vmatprep.subr.mxu0 0.0
        %448 = vmatpush1.msra.mxu0 0.0
        %449 = vmatprep.subr.mxu0 0.0
        %450 = vmatpush1.msra.mxu0 0.0
        %451 = vmatprep.subr.mxu0 0.0
        %452 = vmatpush1.msra.mxu0 0.0
        %453 = vmatprep.mubr.f32.mxu0 0.0
        %454 = vmatmul.mubr.f32.gmra.mrb[0].mxu0 %v388
        %v455 = vpop.f32.mrb[0].mxu0
        %v456 = vadd.f32 0.0, %v455
        %v457 = vpop.f32.mrb[0].mxu0
        %458 = vdwg.mxu0
        %v459 = vmax.f32 %v456, 1e-24
        %v460 = vrsqrt.pop %v459
        %v461 = vmul.f32 %v387, %v460
        %v462 = vld [vmem:[%s242 + $0x8] sm:$0xff]
        %v463 = vmul.f32 %v462, %v462
        %464 = vmatprep.subr.mxu0 0.0
        %465 = vmatpush1.msra.mxu0 %v280
        %466 = vmatprep.subr.mxu0 0.0
        %467 = vmatpush1.msra.mxu0 %v281
        %468 = vmatprep.subr.mxu0 0.0
        %469 = vmatpush1.msra.mxu0 %v282
        %470 = vmatprep.subr.mxu0 0.0
        %471 = vmatpush1.msra.mxu0 %v283
        %472 = vmatprep.subr.mxu0 0.0
        %473 = vmatpush1.msra.mxu0 %v284
        %474 = vmatprep.subr.mxu0 0.0
        %475 = vmatpush1.msra.mxu0 %v285
        %476 = vmatprep.subr.mxu0 0.0
        %477 = vmatpush1.msra.mxu0 %v286
        %478 = vmatprep.subr.mxu0 0.0
        %479 = vmatpush1.msra.mxu0 %v287
        %480 = vmatprep.subr.mxu0 0.0
        %481 = vmatpush1.msra.mxu0 %v288
        %482 = vmatprep.subr.mxu0 0.0
        %483 = vmatpush1.msra.mxu0 %v289
        %484 = vmatprep.subr.mxu0 0.0
        %485 = vmatpush1.msra.mxu0 %v290
        %486 = vmatprep.subr.mxu0 0.0
        %487 = vmatpush1.msra.mxu0 %v291
        %488 = vmatprep.subr.mxu0 0.0
        %489 = vmatpush1.msra.mxu0 %v292
        %490 = vmatprep.subr.mxu0 0.0
        %491 = vmatpush1.msra.mxu0 %v293
        %492 = vmatprep.subr.mxu0 0.0
        %493 = vmatpush1.msra.mxu0 %v294
        %494 = vmatprep.subr.mxu0 0.0
        %495 = vmatpush1.msra.mxu0 %v295
        %496 = vmatprep.subr.mxu0 0.0
        %497 = vmatpush1.msra.mxu0 0.0
        %498 = vmatprep.subr.mxu0 0.0
        %499 = vmatpush1.msra.mxu0 0.0
        %500 = vmatprep.subr.mxu0 0.0
        %501 = vmatpush1.msra.mxu0 0.0
        %502 = vmatprep.subr.mxu0 0.0
        %503 = vmatpush1.msra.mxu0 0.0
        %504 = vmatprep.subr.mxu0 0.0
        %505 = vmatpush1.msra.mxu0 0.0
        %506 = vmatprep.subr.mxu0 0.0
        %507 = vmatpush1.msra.mxu0 0.0
        %508 = vmatprep.subr.mxu0 0.0
        %509 = vmatpush1.msra.mxu0 0.0
        %510 = vmatprep.subr.mxu0 0.0
        %511 = vmatpush1.msra.mxu0 0.0
        %512 = vmatprep.subr.mxu0 0.0
        %513 = vmatpush1.msra.mxu0 0.0
        %514 = vmatprep.subr.mxu0 0.0
        %515 = vmatpush1.msra.mxu0 0.0
        %516 = vmatprep.subr.mxu0 0.0
        %517 = vmatpush1.msra.mxu0 0.0
        %518 = vmatprep.subr.mxu0 0.0
        %519 = vmatpush1.msra.mxu0 0.0
        %520 = vmatprep.subr.mxu0 0.0
        %521 = vmatpush1.msra.mxu0 0.0
        %522 = vmatprep.subr.mxu0 0.0
        %523 = vmatpush1.msra.mxu0 0.0
        %524 = vmatprep.subr.mxu0 0.0
        %525 = vmatpush1.msra.mxu0 0.0
        %526 = vmatprep.subr.mxu0 0.0
        %527 = vmatpush1.msra.mxu0 0.0
        %528 = vmatprep.mubr.f32.mxu0 0.0
        %529 = vmatmul.mubr.f32.gmra.mrb[0].mxu0 %v463
        %v530 = vpop.f32.mrb[0].mxu0
        %v531 = vadd.f32 0.0, %v530
        %v532 = vpop.f32.mrb[0].mxu0
        %533 = vdwg.mxu0
        %v534 = vmax.f32 %v531, 1e-24
        %v535 = vrsqrt.pop %v534
        %v536 = vmul.f32 %v462, %v535
        %v537 = vld [vmem:[%s242 + $0x10] sm:$0xff]
        %v538 = vmul.f32 %v537, %v537
        %539 = vmatprep.subr.mxu0 0.0
        %540 = vmatpush1.msra.mxu0 %v280
        %541 = vmatprep.subr.mxu0 0.0
        %542 = vmatpush1.msra.mxu0 %v281
        %543 = vmatprep.subr.mxu0 0.0
        %544 = vmatpush1.msra.mxu0 %v282
        %545 = vmatprep.subr.mxu0 0.0
        %546 = vmatpush1.msra.mxu0 %v283
        %547 = vmatprep.subr.mxu0 0.0
        %548 = vmatpush1.msra.mxu0 %v284
        %549 = vmatprep.subr.mxu0 0.0
        %550 = vmatpush1.msra.mxu0 %v285
        %551 = vmatprep.subr.mxu0 0.0
        %552 = vmatpush1.msra.mxu0 %v286
        %553 = vmatprep.subr.mxu0 0.0
        %554 = vmatpush1.msra.mxu0 %v287
        %555 = vmatprep.subr.mxu0 0.0
        %556 = vmatpush1.msra.mxu0 %v288
        %557 = vmatprep.subr.mxu0 0.0
        %558 = vmatpush1.msra.mxu0 %v289
        %559 = vmatprep.subr.mxu0 0.0
        %560 = vmatpush1.msra.mxu0 %v290
        %561 = vmatprep.subr.mxu0 0.0
        %562 = vmatpush1.msra.mxu0 %v291
        %563 = vmatprep.subr.mxu0 0.0
        %564 = vmatpush1.msra.mxu0 %v292
        %565 = vmatprep.subr.mxu0 0.0
        %566 = vmatpush1.msra.mxu0 %v293
        %567 = vmatprep.subr.mxu0 0.0
        %568 = vmatpush1.msra.mxu0 %v294
        %569 = vmatprep.subr.mxu0 0.0
        %570 = vmatpush1.msra.mxu0 %v295
        %571 = vmatprep.subr.mxu0 0.0
        %572 = vmatpush1.msra.mxu0 0.0
        %573 = vmatprep.subr.mxu0 0.0
        %574 = vmatpush1.msra.mxu0 0.0
        %575 = vmatprep.subr.mxu0 0.0
        %576 = vmatpush1.msra.mxu0 0.0
        %577 = vmatprep.subr.mxu0 0.0
        %578 = vmatpush1.msra.mxu0 0.0
        %579 = vmatprep.subr.mxu0 0.0
        %580 = vmatpush1.msra.mxu0 0.0
        %581 = vmatprep.subr.mxu0 0.0
        %582 = vmatpush1.msra.mxu0 0.0
        %583 = vmatprep.subr.mxu0 0.0
        %584 = vmatpush1.msra.mxu0 0.0
        %585 = vmatprep.subr.mxu0 0.0
        %586 = vmatpush1.msra.mxu0 0.0
        %587 = vmatprep.subr.mxu0 0.0
        %588 = vmatpush1.msra.mxu0 0.0
        %589 = vmatprep.subr.mxu0 0.0
        %590 = vmatpush1.msra.mxu0 0.0
        %591 = vmatprep.subr.mxu0 0.0
        %592 = vmatpush1.msra.mxu0 0.0
        %593 = vmatprep.subr.mxu0 0.0
        %594 = vmatpush1.msra.mxu0 0.0
        %595 = vmatprep.subr.mxu0 0.0
        %596 = vmatpush1.msra.mxu0 0.0
        %597 = vmatprep.subr.mxu0 0.0
        %598 = vmatpush1.msra.mxu0 0.0
        %599 = vmatprep.subr.mxu0 0.0
        %600 = vmatpush1.msra.mxu0 0.0
        %601 = vmatprep.subr.mxu0 0.0
        %602 = vmatpush1.msra.mxu0 0.0
        %603 = vmatprep.mubr.f32.mxu0 0.0
        %604 = vmatmul.mubr.f32.gmra.mrb[0].mxu0 %v538
        %v605 = vpop.f32.mrb[0].mxu0
        %v606 = vadd.f32 0.0, %v605
        %v607 = vpop.f32.mrb[0].mxu0
        %608 = vdwg.mxu0
        %v609 = vmax.f32 %v606, 1e-24
        %v610 = vrsqrt.pop %v609
        %v611 = vmul.f32 %v537, %v610
        %v612 = vld [vmem:[%s242 + $0x18] sm:$0xff]
        %v613 = vmul.f32 %v612, %v612
        %614 = vmatprep.subr.mxu0 0.0
        %615 = vmatpush1.msra.mxu0 %v280
        %616 = vmatprep.subr.mxu0 0.0
        %617 = vmatpush1.msra.mxu0 %v281
        %618 = vmatprep.subr.mxu0 0.0
        %619 = vmatpush1.msra.mxu0 %v282
        %620 = vmatprep.subr.mxu0 0.0
        %621 = vmatpush1.msra.mxu0 %v283
        %622 = vmatprep.subr.mxu0 0.0
        %623 = vmatpush1.msra.mxu0 %v284
        %624 = vmatprep.subr.mxu0 0.0
        %625 = vmatpush1.msra.mxu0 %v285
        %626 = vmatprep.subr.mxu0 0.0
        %627 = vmatpush1.msra.mxu0 %v286
        %628 = vmatprep.subr.mxu0 0.0
        %629 = vmatpush1.msra.mxu0 %v287
        %630 = vmatprep.subr.mxu0 0.0
        %631 = vmatpush1.msra.mxu0 %v288
        %632 = vmatprep.subr.mxu0 0.0
        %633 = vmatpush1.msra.mxu0 %v289
        %634 = vmatprep.subr.mxu0 0.0
        %635 = vmatpush1.msra.mxu0 %v290
        %636 = vmatprep.subr.mxu0 0.0
        %637 = vmatpush1.msra.mxu0 %v291
        %638 = vmatprep.subr.mxu0 0.0
        %639 = vmatpush1.msra.mxu0 %v292
        %640 = vmatprep.subr.mxu0 0.0
        %641 = vmatpush1.msra.mxu0 %v293
        %642 = vmatprep.subr.mxu0 0.0
        %643 = vmatpush1.msra.mxu0 %v294
        %644 = vmatprep.subr.mxu0 0.0
        %645 = vmatpush1.msra.mxu0 %v295
        %646 = vmatprep.subr.mxu0 0.0
        %647 = vmatpush1.msra.mxu0 0.0
        %648 = vmatprep.subr.mxu0 0.0
        %649 = vmatpush1.msra.mxu0 0.0
        %650 = vmatprep.subr.mxu0 0.0
        %651 = vmatpush1.msra.mxu0 0.0
        %652 = vmatprep.subr.mxu0 0.0
        %653 = vmatpush1.msra.mxu0 0.0
        %654 = vmatprep.subr.mxu0 0.0
        %655 = vmatpush1.msra.mxu0 0.0
        %656 = vmatprep.subr.mxu0 0.0
        %657 = vmatpush1.msra.mxu0 0.0
        %658 = vmatprep.subr.mxu0 0.0
        %659 = vmatpush1.msra.mxu0 0.0
        %660 = vmatprep.subr.mxu0 0.0
        %661 = vmatpush1.msra.mxu0 0.0
        %662 = vmatprep.subr.mxu0 0.0
        %663 = vmatpush1.msra.mxu0 0.0
        %664 = vmatprep.subr.mxu0 0.0
        %665 = vmatpush1.msra.mxu0 0.0
        %666 = vmatprep.subr.mxu0 0.0
        %667 = vmatpush1.msra.mxu0 0.0
        %668 = vmatprep.subr.mxu0 0.0
        %669 = vmatpush1.msra.mxu0 0.0
        %670 = vmatprep.subr.mxu0 0.0
        %671 = vmatpush1.msra.mxu0 0.0
        %672 = vmatprep.subr.mxu0 0.0
        %673 = vmatpush1.msra.mxu0 0.0
        %674 = vmatprep.subr.mxu0 0.0
        %675 = vmatpush1.msra.mxu0 0.0
        %676 = vmatprep.subr.mxu0 0.0
        %677 = vmatpush1.msra.mxu0 0.0
        %678 = vmatprep.mubr.f32.mxu0 0.0
        %679 = vmatmul.mubr.f32.gmra.mrb[0].mxu0 %v613
        %v680 = vpop.f32.mrb[0].mxu0
        %v681 = vadd.f32 0.0, %v680
        %v682 = vpop.f32.mrb[0].mxu0
        %683 = vdwg.mxu0
        %v684 = vmax.f32 %v681, 1e-24
        %v685 = vrsqrt.pop %v684
        %v686 = vmul.f32 %v612, %v685
        %v687 = vmul.f32 %v461, %v386
        %688 = vmatprep.subr.mxu0 0.0
        %689 = vmatpush1.msra.mxu0 %v280
        %690 = vmatprep.subr.mxu0 0.0
        %691 = vmatpush1.msra.mxu0 %v281
        %692 = vmatprep.subr.mxu0 0.0
        %693 = vmatpush1.msra.mxu0 %v282
        %694 = vmatprep.subr.mxu0 0.0
        %695 = vmatpush1.msra.mxu0 %v283
        %696 = vmatprep.subr.mxu0 0.0
        %697 = vmatpush1.msra.mxu0 %v284
        %698 = vmatprep.subr.mxu0 0.0
        %699 = vmatpush1.msra.mxu0 %v285
        %700 = vmatprep.subr.mxu0 0.0
        %701 = vmatpush1.msra.mxu0 %v286
        %702 = vmatprep.subr.mxu0 0.0
        %703 = vmatpush1.msra.mxu0 %v287
        %704 = vmatprep.subr.mxu0 0.0
        %705 = vmatpush1.msra.mxu0 %v288
        %706 = vmatprep.subr.mxu0 0.0
        %707 = vmatpush1.msra.mxu0 %v289
        %708 = vmatprep.subr.mxu0 0.0
        %709 = vmatpush1.msra.mxu0 %v290
        %710 = vmatprep.subr.mxu0 0.0
        %711 = vmatpush1.msra.mxu0 %v291
        %712 = vmatprep.subr.mxu0 0.0
        %713 = vmatpush1.msra.mxu0 %v292
        %714 = vmatprep.subr.mxu0 0.0
        %715 = vmatpush1.msra.mxu0 %v293
        %716 = vmatprep.subr.mxu0 0.0
        %717 = vmatpush1.msra.mxu0 %v294
        %718 = vmatprep.subr.mxu0 0.0
        %719 = vmatpush1.msra.mxu0 %v295
        %720 = vmatprep.subr.mxu0 0.0
        %721 = vmatpush1.msra.mxu0 0.0
        %722 = vmatprep.subr.mxu0 0.0
        %723 = vmatpush1.msra.mxu0 0.0
        %724 = vmatprep.subr.mxu0 0.0
        %725 = vmatpush1.msra.mxu0 0.0
        %726 = vmatprep.subr.mxu0 0.0
        %727 = vmatpush1.msra.mxu0 0.0
        %728 = vmatprep.subr.mxu0 0.0
        %729 = vmatpush1.msra.mxu0 0.0
        %730 = vmatprep.subr.mxu0 0.0
        %731 = vmatpush1.msra.mxu0 0.0
        %732 = vmatprep.subr.mxu0 0.0
        %733 = vmatpush1.msra.mxu0 0.0
        %734 = vmatprep.subr.mxu0 0.0
        %735 = vmatpush1.msra.mxu0 0.0
        %736 = vmatprep.subr.mxu0 0.0
        %737 = vmatpush1.msra.mxu0 0.0
        %738 = vmatprep.subr.mxu0 0.0
        %739 = vmatpush1.msra.mxu0 0.0
        %740 = vmatprep.subr.mxu0 0.0
        %741 = vmatpush1.msra.mxu0 0.0
        %742 = vmatprep.subr.mxu0 0.0
        %743 = vmatpush1.msra.mxu0 0.0
        %744 = vmatprep.subr.mxu0 0.0
        %745 = vmatpush1.msra.mxu0 0.0
        %746 = vmatprep.subr.mxu0 0.0
        %747 = vmatpush1.msra.mxu0 0.0
        %748 = vmatprep.subr.mxu0 0.0
        %749 = vmatpush1.msra.mxu0 0.0
        %750 = vmatprep.subr.mxu0 0.0
        %751 = vmatpush1.msra.mxu0 0.0
        %752 = vmatprep.mubr.f32.mxu0 0.0
        %753 = vmatmul.mubr.f32.gmra.mrb[0].mxu0 %v687
        %v754 = vpop.f32.mrb[0].mxu0
        %v755 = vadd.f32 0.0, %v754
        %v756 = vpop.f32.mrb[0].mxu0
        %757 = vdwg.mxu0
        %v758 = vmul.f32 %v755, 1.442695
        %v759 = vpow.pop %v758
        %760 = vmatprep.subr.mxu0 0.0
        %761 = vmatpush1.msra.mxu0 %v296
        %762 = vmatprep.subr.mxu0 0.0
        %763 = vmatpush1.msra.mxu0 %v297
        %764 = vmatprep.subr.mxu0 0.0
        %765 = vmatpush1.msra.mxu0 %v298
        %766 = vmatprep.subr.mxu0 0.0
        %767 = vmatpush1.msra.mxu0 %v299
        %768 = vmatprep.subr.mxu0 0.0
        %769 = vmatpush1.msra.mxu0 %v300
        %770 = vmatprep.subr.mxu0 0.0
        %771 = vmatpush1.msra.mxu0 %v301
        %772 = vmatprep.subr.mxu0 0.0
        %773 = vmatpush1.msra.mxu0 %v302
        %774 = vmatprep.subr.mxu0 0.0
        %775 = vmatpush1.msra.mxu0 %v303
        %776 = vmatprep.subr.mxu0 0.0
        %777 = vmatpush1.msra.mxu0 %v304
        %778 = vmatprep.subr.mxu0 0.0
        %779 = vmatpush1.msra.mxu0 %v305
        %780 = vmatprep.subr.mxu0 0.0
        %781 = vmatpush1.msra.mxu0 %v306
        %782 = vmatprep.subr.mxu0 0.0
        %783 = vmatpush1.msra.mxu0 %v307
        %784 = vmatprep.subr.mxu0 0.0
        %785 = vmatpush1.msra.mxu0 %v308
        %786 = vmatprep.subr.mxu0 0.0
        %787 = vmatpush1.msra.mxu0 %v309
        %788 = vmatprep.subr.mxu0 0.0
        %789 = vmatpush1.msra.mxu0 %v310
        %790 = vmatprep.subr.mxu0 0.0
        %791 = vmatpush1.msra.mxu0 %v311
        %792 = vmatprep.subr.mxu0 0.0
        %793 = vmatpush1.msra.mxu0 0.0
        %794 = vmatprep.subr.mxu0 0.0
        %795 = vmatpush1.msra.mxu0 0.0
        %796 = vmatprep.subr.mxu0 0.0
        %797 = vmatpush1.msra.mxu0 0.0
        %798 = vmatprep.subr.mxu0 0.0
        %799 = vmatpush1.msra.mxu0 0.0
        %800 = vmatprep.subr.mxu0 0.0
        %801 = vmatpush1.msra.mxu0 0.0
        %802 = vmatprep.subr.mxu0 0.0
        %803 = vmatpush1.msra.mxu0 0.0
        %804 = vmatprep.subr.mxu0 0.0
        %805 = vmatpush1.msra.mxu0 0.0
        %806 = vmatprep.subr.mxu0 0.0
        %807 = vmatpush1.msra.mxu0 0.0
        %808 = vmatprep.subr.mxu0 0.0
        %809 = vmatpush1.msra.mxu0 0.0
        %810 = vmatprep.subr.mxu0 0.0
        %811 = vmatpush1.msra.mxu0 0.0
        %812 = vmatprep.subr.mxu0 0.0
        %813 = vmatpush1.msra.mxu0 0.0
        %814 = vmatprep.subr.mxu0 0.0
        %815 = vmatpush1.msra.mxu0 0.0
        %816 = vmatprep.subr.mxu0 0.0
        %817 = vmatpush1.msra.mxu0 0.0
        %818 = vmatprep.subr.mxu0 0.0
        %819 = vmatpush1.msra.mxu0 0.0
        %820 = vmatprep.subr.mxu0 0.0
        %821 = vmatpush1.msra.mxu0 0.0
        %822 = vmatprep.subr.mxu0 0.0
        %823 = vmatpush1.msra.mxu0 0.0
        %824 = vmatprep.mubr.f32.mxu0 0.0
        %825 = vmatmul.mubr.f32.gmra.mrb[0].mxu0 %v759
        %v826 = vpop.f32.mrb[0].mxu0
        %v827 = vadd.f32 0.0, %v826
        %v828 = vpop.f32.mrb[0].mxu0
        %829 = vdwg.mxu0
        %v830 = vrcp.pop %v827
        %v831 = vmul.f32 %v759, %v830
        %v832 = vmul.f32 %v461, %v831
        %v833 = vadd.f32 %v386, %v832
        %v834 = vmul.f32 %v536, %v386
        %835 = vmatprep.subr.mxu0 0.0
        %836 = vmatpush1.msra.mxu0 %v280
        %837 = vmatprep.subr.mxu0 0.0
        %838 = vmatpush1.msra.mxu0 %v281
        %839 = vmatprep.subr.mxu0 0.0
        %840 = vmatpush1.msra.mxu0 %v282
        %841 = vmatprep.subr.mxu0 0.0
        %842 = vmatpush1.msra.mxu0 %v283
        %843 = vmatprep.subr.mxu0 0.0
        %844 = vmatpush1.msra.mxu0 %v284
        %845 = vmatprep.subr.mxu0 0.0
        %846 = vmatpush1.msra.mxu0 %v285
        %847 = vmatprep.subr.mxu0 0.0
        %848 = vmatpush1.msra.mxu0 %v286
        %849 = vmatprep.subr.mxu0 0.0
        %850 = vmatpush1.msra.mxu0 %v287
        %851 = vmatprep.subr.mxu0 0.0
        %852 = vmatpush1.msra.mxu0 %v288
        %853 = vmatprep.subr.mxu0 0.0
        %854 = vmatpush1.msra.mxu0 %v289
        %855 = vmatprep.subr.mxu0 0.0
        %856 = vmatpush1.msra.mxu0 %v290
        %857 = vmatprep.subr.mxu0 0.0
        %858 = vmatpush1.msra.mxu0 %v291
        %859 = vmatprep.subr.mxu0 0.0
        %860 = vmatpush1.msra.mxu0 %v292
        %861 = vmatprep.subr.mxu0 0.0
        %862 = vmatpush1.msra.mxu0 %v293
        %863 = vmatprep.subr.mxu0 0.0
        %864 = vmatpush1.msra.mxu0 %v294
        %865 = vmatprep.subr.mxu0 0.0
        %866 = vmatpush1.msra.mxu0 %v295
        %867 = vmatprep.subr.mxu0 0.0
        %868 = vmatpush1.msra.mxu0 0.0
        %869 = vmatprep.subr.mxu0 0.0
        %870 = vmatpush1.msra.mxu0 0.0
        %871 = vmatprep.subr.mxu0 0.0
        %872 = vmatpush1.msra.mxu0 0.0
        %873 = vmatprep.subr.mxu0 0.0
        %874 = vmatpush1.msra.mxu0 0.0
        %875 = vmatprep.subr.mxu0 0.0
        %876 = vmatpush1.msra.mxu0 0.0
        %877 = vmatprep.subr.mxu0 0.0
        %878 = vmatpush1.msra.mxu0 0.0
        %879 = vmatprep.subr.mxu0 0.0
        %880 = vmatpush1.msra.mxu0 0.0
        %881 = vmatprep.subr.mxu0 0.0
        %882 = vmatpush1.msra.mxu0 0.0
        %883 = vmatprep.subr.mxu0 0.0
        %884 = vmatpush1.msra.mxu0 0.0
        %885 = vmatprep.subr.mxu0 0.0
        %886 = vmatpush1.msra.mxu0 0.0
        %887 = vmatprep.subr.mxu0 0.0
        %888 = vmatpush1.msra.mxu0 0.0
        %889 = vmatprep.subr.mxu0 0.0
        %890 = vmatpush1.msra.mxu0 0.0
        %891 = vmatprep.subr.mxu0 0.0
        %892 = vmatpush1.msra.mxu0 0.0
        %893 = vmatprep.subr.mxu0 0.0
        %894 = vmatpush1.msra.mxu0 0.0
        %895 = vmatprep.subr.mxu0 0.0
        %896 = vmatpush1.msra.mxu0 0.0
        %897 = vmatprep.subr.mxu0 0.0
        %898 = vmatpush1.msra.mxu0 0.0
        %899 = vmatprep.mubr.f32.mxu0 0.0
        %900 = vmatmul.mubr.f32.gmra.mrb[0].mxu0 %v834
        %v901 = vpop.f32.mrb[0].mxu0
        %v902 = vadd.f32 0.0, %v901
        %v903 = vpop.f32.mrb[0].mxu0
        %904 = vdwg.mxu0
        %v905 = vmul.f32 %v902, 1.442695
        %v906 = vpow.pop %v905
        %907 = vmatprep.subr.mxu0 0.0
        %908 = vmatpush1.msra.mxu0 %v296
        %909 = vmatprep.subr.mxu0 0.0
        %910 = vmatpush1.msra.mxu0 %v297
        %911 = vmatprep.subr.mxu0 0.0
        %912 = vmatpush1.msra.mxu0 %v298
        %913 = vmatprep.subr.mxu0 0.0
        %914 = vmatpush1.msra.mxu0 %v299
        %915 = vmatprep.subr.mxu0 0.0
        %916 = vmatpush1.msra.mxu0 %v300
        %917 = vmatprep.subr.mxu0 0.0
        %918 = vmatpush1.msra.mxu0 %v301
        %919 = vmatprep.subr.mxu0 0.0
        %920 = vmatpush1.msra.mxu0 %v302
        %921 = vmatprep.subr.mxu0 0.0
        %922 = vmatpush1.msra.mxu0 %v303
        %923 = vmatprep.subr.mxu0 0.0
        %924 = vmatpush1.msra.mxu0 %v304
        %925 = vmatprep.subr.mxu0 0.0
        %926 = vmatpush1.msra.mxu0 %v305
        %927 = vmatprep.subr.mxu0 0.0
        %928 = vmatpush1.msra.mxu0 %v306
        %929 = vmatprep.subr.mxu0 0.0
        %930 = vmatpush1.msra.mxu0 %v307
        %931 = vmatprep.subr.mxu0 0.0
        %932 = vmatpush1.msra.mxu0 %v308
        %933 = vmatprep.subr.mxu0 0.0
        %934 = vmatpush1.msra.mxu0 %v309
        %935 = vmatprep.subr.mxu0 0.0
        %936 = vmatpush1.msra.mxu0 %v310
        %937 = vmatprep.subr.mxu0 0.0
        %938 = vmatpush1.msra.mxu0 %v311
        %939 = vmatprep.subr.mxu0 0.0
        %940 = vmatpush1.msra.mxu0 0.0
        %941 = vmatprep.subr.mxu0 0.0
        %942 = vmatpush1.msra.mxu0 0.0
        %943 = vmatprep.subr.mxu0 0.0
        %944 = vmatpush1.msra.mxu0 0.0
        %945 = vmatprep.subr.mxu0 0.0
        %946 = vmatpush1.msra.mxu0 0.0
        %947 = vmatprep.subr.mxu0 0.0
        %948 = vmatpush1.msra.mxu0 0.0
        %949 = vmatprep.subr.mxu0 0.0
        %950 = vmatpush1.msra.mxu0 0.0
        %951 = vmatprep.subr.mxu0 0.0
        %952 = vmatpush1.msra.mxu0 0.0
        %953 = vmatprep.subr.mxu0 0.0
        %954 = vmatpush1.msra.mxu0 0.0
        %955 = vmatprep.subr.mxu0 0.0
        %956 = vmatpush1.msra.mxu0 0.0
        %957 = vmatprep.subr.mxu0 0.0
        %958 = vmatpush1.msra.mxu0 0.0
        %959 = vmatprep.subr.mxu0 0.0
        %960 = vmatpush1.msra.mxu0 0.0
        %961 = vmatprep.subr.mxu0 0.0
        %962 = vmatpush1.msra.mxu0 0.0
        %963 = vmatprep.subr.mxu0 0.0
        %964 = vmatpush1.msra.mxu0 0.0
        %965 = vmatprep.subr.mxu0 0.0
        %966 = vmatpush1.msra.mxu0 0.0
        %967 = vmatprep.subr.mxu0 0.0
        %968 = vmatpush1.msra.mxu0 0.0
        %969 = vmatprep.subr.mxu0 0.0
        %970 = vmatpush1.msra.mxu0 0.0
        %971 = vmatprep.mubr.f32.mxu0 0.0
        %972 = vmatmul.mubr.f32.gmra.mrb[0].mxu0 %v906
        %v973 = vpop.f32.mrb[0].mxu0
        %v974 = vadd.f32 0.0, %v973
        %v975 = vpop.f32.mrb[0].mxu0
        %976 = vdwg.mxu0
        %v977 = vrcp.pop %v974
        %v978 = vmul.f32 %v906, %v977
        %v979 = vmul.f32 %v536, %v978
        %v980 = vadd.f32 %v833, %v979
        %v981 = vmul.f32 %v611, %v386
        %982 = vmatprep.subr.mxu0 0.0
        %983 = vmatpush1.msra.mxu0 %v280
        %984 = vmatprep.subr.mxu0 0.0
        %985 = vmatpush1.msra.mxu0 %v281
        %986 = vmatprep.subr.mxu0 0.0
        %987 = vmatpush1.msra.mxu0 %v282
        %988 = vmatprep.subr.mxu0 0.0
        %989 = vmatpush1.msra.mxu0 %v283
        %990 = vmatprep.subr.mxu0 0.0
        %991 = vmatpush1.msra.mxu0 %v284
        %992 = vmatprep.subr.mxu0 0.0
        %993 = vmatpush1.msra.mxu0 %v285
        %994 = vmatprep.subr.mxu0 0.0
        %995 = vmatpush1.msra.mxu0 %v286
        %996 = vmatprep.subr.mxu0 0.0
        %997 = vmatpush1.msra.mxu0 %v287
        %998 = vmatprep.subr.mxu0 0.0
        %999 = vmatpush1.msra.mxu0 %v288
        %1000 = vmatprep.subr.mxu0 0.0
        %1001 = vmatpush1.msra.mxu0 %v289
        %1002 = vmatprep.subr.mxu0 0.0
        %1003 = vmatpush1.msra.mxu0 %v290
        %1004 = vmatprep.subr.mxu0 0.0
        %1005 = vmatpush1.msra.mxu0 %v291
        %1006 = vmatprep.subr.mxu0 0.0
        %1007 = vmatpush1.msra.mxu0 %v292
        %1008 = vmatprep.subr.mxu0 0.0
        %1009 = vmatpush1.msra.mxu0 %v293
        %1010 = vmatprep.subr.mxu0 0.0
        %1011 = vmatpush1.msra.mxu0 %v294
        %1012 = vmatprep.subr.mxu0 0.0
        %1013 = vmatpush1.msra.mxu0 %v295
        %1014 = vmatprep.subr.mxu0 0.0
        %1015 = vmatpush1.msra.mxu0 0.0
        %1016 = vmatprep.subr.mxu0 0.0
        %1017 = vmatpush1.msra.mxu0 0.0
        %1018 = vmatprep.subr.mxu0 0.0
        %1019 = vmatpush1.msra.mxu0 0.0
        %1020 = vmatprep.subr.mxu0 0.0
        %1021 = vmatpush1.msra.mxu0 0.0
        %1022 = vmatprep.subr.mxu0 0.0
        %1023 = vmatpush1.msra.mxu0 0.0
        %1024 = vmatprep.subr.mxu0 0.0
        %1025 = vmatpush1.msra.mxu0 0.0
        %1026 = vmatprep.subr.mxu0 0.0
        %1027 = vmatpush1.msra.mxu0 0.0
        %1028 = vmatprep.subr.mxu0 0.0
        %1029 = vmatpush1.msra.mxu0 0.0
        %1030 = vmatprep.subr.mxu0 0.0
        %1031 = vmatpush1.msra.mxu0 0.0
        %1032 = vmatprep.subr.mxu0 0.0
        %1033 = vmatpush1.msra.mxu0 0.0
        %1034 = vmatprep.subr.mxu0 0.0
        %1035 = vmatpush1.msra.mxu0 0.0
        %1036 = vmatprep.subr.mxu0 0.0
        %1037 = vmatpush1.msra.mxu0 0.0
        %1038 = vmatprep.subr.mxu0 0.0
        %1039 = vmatpush1.msra.mxu0 0.0
        %1040 = vmatprep.subr.mxu0 0.0
        %1041 = vmatpush1.msra.mxu0 0.0
        %1042 = vmatprep.subr.mxu0 0.0
        %1043 = vmatpush1.msra.mxu0 0.0
        %1044 = vmatprep.subr.mxu0 0.0
        %1045 = vmatpush1.msra.mxu0 0.0
        %1046 = vmatprep.mubr.f32.mxu0 0.0
        %1047 = vmatmul.mubr.f32.gmra.mrb[0].mxu0 %v981
        %v1048 = vpop.f32.mrb[0].mxu0
        %v1049 = vadd.f32 0.0, %v1048
        %v1050 = vpop.f32.mrb[0].mxu0
        %1051 = vdwg.mxu0
        %v1052 = vmul.f32 %v1049, 1.442695
        %v1053 = vpow.pop %v1052
        %1054 = vmatprep.subr.mxu0 0.0
        %1055 = vmatpush1.msra.mxu0 %v296
        %1056 = vmatprep.subr.mxu0 0.0
        %1057 = vmatpush1.msra.mxu0 %v297
        %1058 = vmatprep.subr.mxu0 0.0
        %1059 = vmatpush1.msra.mxu0 %v298
        %1060 = vmatprep.subr.mxu0 0.0
        %1061 = vmatpush1.msra.mxu0 %v299
        %1062 = vmatprep.subr.mxu0 0.0
        %1063 = vmatpush1.msra.mxu0 %v300
        %1064 = vmatprep.subr.mxu0 0.0
        %1065 = vmatpush1.msra.mxu0 %v301
        %1066 = vmatprep.subr.mxu0 0.0
        %1067 = vmatpush1.msra.mxu0 %v302
        %1068 = vmatprep.subr.mxu0 0.0
        %1069 = vmatpush1.msra.mxu0 %v303
        %1070 = vmatprep.subr.mxu0 0.0
        %1071 = vmatpush1.msra.mxu0 %v304
        %1072 = vmatprep.subr.mxu0 0.0
        %1073 = vmatpush1.msra.mxu0 %v305
        %1074 = vmatprep.subr.mxu0 0.0
        %1075 = vmatpush1.msra.mxu0 %v306
        %1076 = vmatprep.subr.mxu0 0.0
        %1077 = vmatpush1.msra.mxu0 %v307
        %1078 = vmatprep.subr.mxu0 0.0
        %1079 = vmatpush1.msra.mxu0 %v308
        %1080 = vmatprep.subr.mxu0 0.0
        %1081 = vmatpush1.msra.mxu0 %v309
        %1082 = vmatprep.subr.mxu0 0.0
        %1083 = vmatpush1.msra.mxu0 %v310
        %1084 = vmatprep.subr.mxu0 0.0
        %1085 = vmatpush1.msra.mxu0 %v311
        %1086 = vmatprep.subr.mxu0 0.0
        %1087 = vmatpush1.msra.mxu0 0.0
        %1088 = vmatprep.subr.mxu0 0.0
        %1089 = vmatpush1.msra.mxu0 0.0
        %1090 = vmatprep.subr.mxu0 0.0
        %1091 = vmatpush1.msra.mxu0 0.0
        %1092 = vmatprep.subr.mxu0 0.0
        %1093 = vmatpush1.msra.mxu0 0.0
        %1094 = vmatprep.subr.mxu0 0.0
        %1095 = vmatpush1.msra.mxu0 0.0
        %1096 = vmatprep.subr.mxu0 0.0
        %1097 = vmatpush1.msra.mxu0 0.0
        %1098 = vmatprep.subr.mxu0 0.0
        %1099 = vmatpush1.msra.mxu0 0.0
        %1100 = vmatprep.subr.mxu0 0.0
        %1101 = vmatpush1.msra.mxu0 0.0
        %1102 = vmatprep.subr.mxu0 0.0
        %1103 = vmatpush1.msra.mxu0 0.0
        %1104 = vmatprep.subr.mxu0 0.0
        %1105 = vmatpush1.msra.mxu0 0.0
        %1106 = vmatprep.subr.mxu0 0.0
        %1107 = vmatpush1.msra.mxu0 0.0
        %1108 = vmatprep.subr.mxu0 0.0
        %1109 = vmatpush1.msra.mxu0 0.0
        %1110 = vmatprep.subr.mxu0 0.0
        %1111 = vmatpush1.msra.mxu0 0.0
        %1112 = vmatprep.subr.mxu0 0.0
        %1113 = vmatpush1.msra.mxu0 0.0
        %1114 = vmatprep.subr.mxu0 0.0
        %1115 = vmatpush1.msra.mxu0 0.0
        %1116 = vmatprep.subr.mxu0 0.0
        %1117 = vmatpush1.msra.mxu0 0.0
        %1118 = vmatprep.mubr.f32.mxu0 0.0
        %1119 = vmatmul.mubr.f32.gmra.mrb[0].mxu0 %v1053
        %v1120 = vpop.f32.mrb[0].mxu0
        %v1121 = vadd.f32 0.0, %v1120
        %v1122 = vpop.f32.mrb[0].mxu0
        %1123 = vdwg.mxu0
        %v1124 = vrcp.pop %v1121
        %v1125 = vmul.f32 %v1053, %v1124
        %v1126 = vmul.f32 %v611, %v1125
        %v1127 = vadd.f32 %v980, %v1126
        %v1128 = vmul.f32 %v686, %v386
        %1129 = vmatprep.subr.mxu0 0.0
        %1130 = vmatpush1.msra.mxu0 %v280
        %1131 = vmatprep.subr.mxu0 0.0
        %1132 = vmatpush1.msra.mxu0 %v281
        %1133 = vmatprep.subr.mxu0 0.0
        %1134 = vmatpush1.msra.mxu0 %v282
        %1135 = vmatprep.subr.mxu0 0.0
        %1136 = vmatpush1.msra.mxu0 %v283
        %1137 = vmatprep.subr.mxu0 0.0
        %1138 = vmatpush1.msra.mxu0 %v284
        %1139 = vmatprep.subr.mxu0 0.0
        %1140 = vmatpush1.msra.mxu0 %v285
        %1141 = vmatprep.subr.mxu0 0.0
        %1142 = vmatpush1.msra.mxu0 %v286
        %1143 = vmatprep.subr.mxu0 0.0
        %1144 = vmatpush1.msra.mxu0 %v287
        %1145 = vmatprep.subr.mxu0 0.0
        %1146 = vmatpush1.msra.mxu0 %v288
        %1147 = vmatprep.subr.mxu0 0.0
        %1148 = vmatpush1.msra.mxu0 %v289
        %1149 = vmatprep.subr.mxu0 0.0
        %1150 = vmatpush1.msra.mxu0 %v290
        %1151 = vmatprep.subr.mxu0 0.0
        %1152 = vmatpush1.msra.mxu0 %v291
        %1153 = vmatprep.subr.mxu0 0.0
        %1154 = vmatpush1.msra.mxu0 %v292
        %1155 = vmatprep.subr.mxu0 0.0
        %1156 = vmatpush1.msra.mxu0 %v293
        %1157 = vmatprep.subr.mxu0 0.0
        %1158 = vmatpush1.msra.mxu0 %v294
        %1159 = vmatprep.subr.mxu0 0.0
        %1160 = vmatpush1.msra.mxu0 %v295
        %1161 = vmatprep.subr.mxu0 0.0
        %1162 = vmatpush1.msra.mxu0 0.0
        %1163 = vmatprep.subr.mxu0 0.0
        %1164 = vmatpush1.msra.mxu0 0.0
        %1165 = vmatprep.subr.mxu0 0.0
        %1166 = vmatpush1.msra.mxu0 0.0
        %1167 = vmatprep.subr.mxu0 0.0
        %1168 = vmatpush1.msra.mxu0 0.0
        %1169 = vmatprep.subr.mxu0 0.0
        %1170 = vmatpush1.msra.mxu0 0.0
        %1171 = vmatprep.subr.mxu0 0.0
        %1172 = vmatpush1.msra.mxu0 0.0
        %1173 = vmatprep.subr.mxu0 0.0
        %1174 = vmatpush1.msra.mxu0 0.0
        %1175 = vmatprep.subr.mxu0 0.0
        %1176 = vmatpush1.msra.mxu0 0.0
        %1177 = vmatprep.subr.mxu0 0.0
        %1178 = vmatpush1.msra.mxu0 0.0
        %1179 = vmatprep.subr.mxu0 0.0
        %1180 = vmatpush1.msra.mxu0 0.0
        %1181 = vmatprep.subr.mxu0 0.0
        %1182 = vmatpush1.msra.mxu0 0.0
        %1183 = vmatprep.subr.mxu0 0.0
        %1184 = vmatpush1.msra.mxu0 0.0
        %1185 = vmatprep.subr.mxu0 0.0
        %1186 = vmatpush1.msra.mxu0 0.0
        %1187 = vmatprep.subr.mxu0 0.0
        %1188 = vmatpush1.msra.mxu0 0.0
        %1189 = vmatprep.subr.mxu0 0.0
        %1190 = vmatpush1.msra.mxu0 0.0
        %1191 = vmatprep.subr.mxu0 0.0
        %1192 = vmatpush1.msra.mxu0 0.0
        %1193 = vmatprep.mubr.f32.mxu0 0.0
        %1194 = vmatmul.mubr.f32.gmra.mrb[0].mxu0 %v1128
        %v1195 = vpop.f32.mrb[0].mxu0
        %v1196 = vadd.f32 0.0, %v1195
        %v1197 = vpop.f32.mrb[0].mxu0
        %1198 = vdwg.mxu0
        %v1199 = vmul.f32 %v1196, 1.442695
        %v1200 = vpow.pop %v1199
        %1201 = vmatprep.subr.mxu0 0.0
        %1202 = vmatpush1.msra.mxu0 %v296
        %1203 = vmatprep.subr.mxu0 0.0
        %1204 = vmatpush1.msra.mxu0 %v297
        %1205 = vmatprep.subr.mxu0 0.0
        %1206 = vmatpush1.msra.mxu0 %v298
        %1207 = vmatprep.subr.mxu0 0.0
        %1208 = vmatpush1.msra.mxu0 %v299
        %1209 = vmatprep.subr.mxu0 0.0
        %1210 = vmatpush1.msra.mxu0 %v300
        %1211 = vmatprep.subr.mxu0 0.0
        %1212 = vmatpush1.msra.mxu0 %v301
        %1213 = vmatprep.subr.mxu0 0.0
        %1214 = vmatpush1.msra.mxu0 %v302
        %1215 = vmatprep.subr.mxu0 0.0
        %1216 = vmatpush1.msra.mxu0 %v303
        %1217 = vmatprep.subr.mxu0 0.0
        %1218 = vmatpush1.msra.mxu0 %v304
        %1219 = vmatprep.subr.mxu0 0.0
        %1220 = vmatpush1.msra.mxu0 %v305
        %1221 = vmatprep.subr.mxu0 0.0
        %1222 = vmatpush1.msra.mxu0 %v306
        %1223 = vmatprep.subr.mxu0 0.0
        %1224 = vmatpush1.msra.mxu0 %v307
        %1225 = vmatprep.subr.mxu0 0.0
        %1226 = vmatpush1.msra.mxu0 %v308
        %1227 = vmatprep.subr.mxu0 0.0
        %1228 = vmatpush1.msra.mxu0 %v309
        %1229 = vmatprep.subr.mxu0 0.0
        %1230 = vmatpush1.msra.mxu0 %v310
        %1231 = vmatprep.subr.mxu0 0.0
        %1232 = vmatpush1.msra.mxu0 %v311
        %1233 = vmatprep.subr.mxu0 0.0
        %1234 = vmatpush1.msra.mxu0 0.0
        %1235 = vmatprep.subr.mxu0 0.0
        %1236 = vmatpush1.msra.mxu0 0.0
        %1237 = vmatprep.subr.mxu0 0.0
        %1238 = vmatpush1.msra.mxu0 0.0
        %1239 = vmatprep.subr.mxu0 0.0
        %1240 = vmatpush1.msra.mxu0 0.0
        %1241 = vmatprep.subr.mxu0 0.0
        %1242 = vmatpush1.msra.mxu0 0.0
        %1243 = vmatprep.subr.mxu0 0.0
        %1244 = vmatpush1.msra.mxu0 0.0
        %1245 = vmatprep.subr.mxu0 0.0
        %1246 = vmatpush1.msra.mxu0 0.0
        %1247 = vmatprep.subr.mxu0 0.0
        %1248 = vmatpush1.msra.mxu0 0.0
        %1249 = vmatprep.subr.mxu0 0.0
        %1250 = vmatpush1.msra.mxu0 0.0
        %1251 = vmatprep.subr.mxu0 0.0
        %1252 = vmatpush1.msra.mxu0 0.0
        %1253 = vmatprep.subr.mxu0 0.0
        %1254 = vmatpush1.msra.mxu0 0.0
        %1255 = vmatprep.subr.mxu0 0.0
        %1256 = vmatpush1.msra.mxu0 0.0
        %1257 = vmatprep.subr.mxu0 0.0
        %1258 = vmatpush1.msra.mxu0 0.0
        %1259 = vmatprep.subr.mxu0 0.0
        %1260 = vmatpush1.msra.mxu0 0.0
        %1261 = vmatprep.subr.mxu0 0.0
        %1262 = vmatpush1.msra.mxu0 0.0
        %1263 = vmatprep.subr.mxu0 0.0
        %1264 = vmatpush1.msra.mxu0 0.0
        %1265 = vmatprep.mubr.f32.mxu0 0.0
        %1266 = vmatmul.mubr.f32.gmra.mrb[0].mxu0 %v1200
        %v1267 = vpop.f32.mrb[0].mxu0
        %v1268 = vadd.f32 0.0, %v1267
        %v1269 = vpop.f32.mrb[0].mxu0
        %1270 = vdwg.mxu0
        %v1271 = vrcp.pop %v1268
        %v1272 = vmul.f32 %v1200, %v1271
        %v1273 = vmul.f32 %v686, %v1272
        %v1274 = vadd.f32 %v1127, %v1273
        %v1275 = vmul.f32 %v1274, %v1274
        %1276 = vmatprep.subr.mxu0 0.0
        %1277 = vmatpush1.msra.mxu0 %v280
        %1278 = vmatprep.subr.mxu0 0.0
        %1279 = vmatpush1.msra.mxu0 %v281
        %1280 = vmatprep.subr.mxu0 0.0
        %1281 = vmatpush1.msra.mxu0 %v282
        %1282 = vmatprep.subr.mxu0 0.0
        %1283 = vmatpush1.msra.mxu0 %v283
        %1284 = vmatprep.subr.mxu0 0.0
        %1285 = vmatpush1.msra.mxu0 %v284
        %1286 = vmatprep.subr.mxu0 0.0
        %1287 = vmatpush1.msra.mxu0 %v285
        %1288 = vmatprep.subr.mxu0 0.0
        %1289 = vmatpush1.msra.mxu0 %v286
        %1290 = vmatprep.subr.mxu0 0.0
        %1291 = vmatpush1.msra.mxu0 %v287
        %1292 = vmatprep.subr.mxu0 0.0
        %1293 = vmatpush1.msra.mxu0 %v288
        %1294 = vmatprep.subr.mxu0 0.0
        %1295 = vmatpush1.msra.mxu0 %v289
        %1296 = vmatprep.subr.mxu0 0.0
        %1297 = vmatpush1.msra.mxu0 %v290
        %1298 = vmatprep.subr.mxu0 0.0
        %1299 = vmatpush1.msra.mxu0 %v291
        %1300 = vmatprep.subr.mxu0 0.0
        %1301 = vmatpush1.msra.mxu0 %v292
        %1302 = vmatprep.subr.mxu0 0.0
        %1303 = vmatpush1.msra.mxu0 %v293
        %1304 = vmatprep.subr.mxu0 0.0
        %1305 = vmatpush1.msra.mxu0 %v294
        %1306 = vmatprep.subr.mxu0 0.0
        %1307 = vmatpush1.msra.mxu0 %v295
        %1308 = vmatprep.subr.mxu0 0.0
        %1309 = vmatpush1.msra.mxu0 0.0
        %1310 = vmatprep.subr.mxu0 0.0
        %1311 = vmatpush1.msra.mxu0 0.0
        %1312 = vmatprep.subr.mxu0 0.0
        %1313 = vmatpush1.msra.mxu0 0.0
        %1314 = vmatprep.subr.mxu0 0.0
        %1315 = vmatpush1.msra.mxu0 0.0
        %1316 = vmatprep.subr.mxu0 0.0
        %1317 = vmatpush1.msra.mxu0 0.0
        %1318 = vmatprep.subr.mxu0 0.0
        %1319 = vmatpush1.msra.mxu0 0.0
        %1320 = vmatprep.subr.mxu0 0.0
        %1321 = vmatpush1.msra.mxu0 0.0
        %1322 = vmatprep.subr.mxu0 0.0
        %1323 = vmatpush1.msra.mxu0 0.0
        %1324 = vmatprep.subr.mxu0 0.0
        %1325 = vmatpush1.msra.mxu0 0.0
        %1326 = vmatprep.subr.mxu0 0.0
        %1327 = vmatpush1.msra.mxu0 0.0
        %1328 = vmatprep.subr.mxu0 0.0
        %1329 = vmatpush1.msra.mxu0 0.0
        %1330 = vmatprep.subr.mxu0 0.0
        %1331 = vmatpush1.msra.mxu0 0.0
        %1332 = vmatprep.subr.mxu0 0.0
        %1333 = vmatpush1.msra.mxu0 0.0
        %1334 = vmatprep.subr.mxu0 0.0
        %1335 = vmatpush1.msra.mxu0 0.0
        %1336 = vmatprep.subr.mxu0 0.0
        %1337 = vmatpush1.msra.mxu0 0.0
        %1338 = vmatprep.subr.mxu0 0.0
        %1339 = vmatpush1.msra.mxu0 0.0
        %1340 = vmatprep.mubr.f32.mxu0 0.0
        %1341 = vmatmul.mubr.f32.gmra.mrb[0].mxu0 %v1275
        %v1342 = vpop.f32.mrb[0].mxu0
        %v1343 = vadd.f32 0.0, %v1342
        %v1344 = vpop.f32.mrb[0].mxu0
        %1345 = vdwg.mxu0
        %v1346 = vmax.f32 %v1343, 1e-24
        %v1347 = vrsqrt.pop %v1346
        %v1348 = vmul.f32 %v1274, %v1347
        %v1349 = vmul.f32 %v461, %v1348
        %1350 = vmatprep.subr.mxu0 0.0
        %1351 = vmatpush1.msra.mxu0 %v280
        %1352 = vmatprep.subr.mxu0 0.0
        %1353 = vmatpush1.msra.mxu0 %v281
        %1354 = vmatprep.subr.mxu0 0.0
        %1355 = vmatpush1.msra.mxu0 %v282
        %1356 = vmatprep.subr.mxu0 0.0
        %1357 = vmatpush1.msra.mxu0 %v283
        %1358 = vmatprep.subr.mxu0 0.0
        %1359 = vmatpush1.msra.mxu0 %v284
        %1360 = vmatprep.subr.mxu0 0.0
        %1361 = vmatpush1.msra.mxu0 %v285
        %1362 = vmatprep.subr.mxu0 0.0
        %1363 = vmatpush1.msra.mxu0 %v286
        %1364 = vmatprep.subr.mxu0 0.0
        %1365 = vmatpush1.msra.mxu0 %v287
        %1366 = vmatprep.subr.mxu0 0.0
        %1367 = vmatpush1.msra.mxu0 %v288
        %1368 = vmatprep.subr.mxu0 0.0
        %1369 = vmatpush1.msra.mxu0 %v289
        %1370 = vmatprep.subr.mxu0 0.0
        %1371 = vmatpush1.msra.mxu0 %v290
        %1372 = vmatprep.subr.mxu0 0.0
        %1373 = vmatpush1.msra.mxu0 %v291
        %1374 = vmatprep.subr.mxu0 0.0
        %1375 = vmatpush1.msra.mxu0 %v292
        %1376 = vmatprep.subr.mxu0 0.0
        %1377 = vmatpush1.msra.mxu0 %v293
        %1378 = vmatprep.subr.mxu0 0.0
        %1379 = vmatpush1.msra.mxu0 %v294
        %1380 = vmatprep.subr.mxu0 0.0
        %1381 = vmatpush1.msra.mxu0 %v295
        %1382 = vmatprep.subr.mxu0 0.0
        %1383 = vmatpush1.msra.mxu0 0.0
        %1384 = vmatprep.subr.mxu0 0.0
        %1385 = vmatpush1.msra.mxu0 0.0
        %1386 = vmatprep.subr.mxu0 0.0
        %1387 = vmatpush1.msra.mxu0 0.0
        %1388 = vmatprep.subr.mxu0 0.0
        %1389 = vmatpush1.msra.mxu0 0.0
        %1390 = vmatprep.subr.mxu0 0.0
        %1391 = vmatpush1.msra.mxu0 0.0
        %1392 = vmatprep.subr.mxu0 0.0
        %1393 = vmatpush1.msra.mxu0 0.0
        %1394 = vmatprep.subr.mxu0 0.0
        %1395 = vmatpush1.msra.mxu0 0.0
        %1396 = vmatprep.subr.mxu0 0.0
        %1397 = vmatpush1.msra.mxu0 0.0
        %1398 = vmatprep.subr.mxu0 0.0
        %1399 = vmatpush1.msra.mxu0 0.0
        %1400 = vmatprep.subr.mxu0 0.0
        %1401 = vmatpush1.msra.mxu0 0.0
        %1402 = vmatprep.subr.mxu0 0.0
        %1403 = vmatpush1.msra.mxu0 0.0
        %1404 = vmatprep.subr.mxu0 0.0
        %1405 = vmatpush1.msra.mxu0 0.0
        %1406 = vmatprep.subr.mxu0 0.0
        %1407 = vmatpush1.msra.mxu0 0.0
        %1408 = vmatprep.subr.mxu0 0.0
        %1409 = vmatpush1.msra.mxu0 0.0
        %1410 = vmatprep.subr.mxu0 0.0
        %1411 = vmatpush1.msra.mxu0 0.0
        %1412 = vmatprep.subr.mxu0 0.0
        %1413 = vmatpush1.msra.mxu0 0.0
        %1414 = vmatprep.mubr.f32.mxu0 0.0
        %1415 = vmatmul.mubr.f32.gmra.mrb[0].mxu0 %v1349
        %v1416 = vpop.f32.mrb[0].mxu0
        %v1417 = vadd.f32 0.0, %v1416
        %v1418 = vpop.f32.mrb[0].mxu0
        %1419 = vdwg.mxu0
        %v1420 = vmul.f32 %v1417, 1.442695
        %v1421 = vpow.pop %v1420
        %1422 = vmatprep.subr.mxu0 0.0
        %1423 = vmatpush1.msra.mxu0 %v296
        %1424 = vmatprep.subr.mxu0 0.0
        %1425 = vmatpush1.msra.mxu0 %v297
        %1426 = vmatprep.subr.mxu0 0.0
        %1427 = vmatpush1.msra.mxu0 %v298
        %1428 = vmatprep.subr.mxu0 0.0
        %1429 = vmatpush1.msra.mxu0 %v299
        %1430 = vmatprep.subr.mxu0 0.0
        %1431 = vmatpush1.msra.mxu0 %v300
        %1432 = vmatprep.subr.mxu0 0.0
        %1433 = vmatpush1.msra.mxu0 %v301
        %1434 = vmatprep.subr.mxu0 0.0
        %1435 = vmatpush1.msra.mxu0 %v302
        %1436 = vmatprep.subr.mxu0 0.0
        %1437 = vmatpush1.msra.mxu0 %v303
        %1438 = vmatprep.subr.mxu0 0.0
        %1439 = vmatpush1.msra.mxu0 %v304
        %1440 = vmatprep.subr.mxu0 0.0
        %1441 = vmatpush1.msra.mxu0 %v305
        %1442 = vmatprep.subr.mxu0 0.0
        %1443 = vmatpush1.msra.mxu0 %v306
        %1444 = vmatprep.subr.mxu0 0.0
        %1445 = vmatpush1.msra.mxu0 %v307
        %1446 = vmatprep.subr.mxu0 0.0
        %1447 = vmatpush1.msra.mxu0 %v308
        %1448 = vmatprep.subr.mxu0 0.0
        %1449 = vmatpush1.msra.mxu0 %v309
        %1450 = vmatprep.subr.mxu0 0.0
        %1451 = vmatpush1.msra.mxu0 %v310
        %1452 = vmatprep.subr.mxu0 0.0
        %1453 = vmatpush1.msra.mxu0 %v311
        %1454 = vmatprep.subr.mxu0 0.0
        %1455 = vmatpush1.msra.mxu0 0.0
        %1456 = vmatprep.subr.mxu0 0.0
        %1457 = vmatpush1.msra.mxu0 0.0
        %1458 = vmatprep.subr.mxu0 0.0
        %1459 = vmatpush1.msra.mxu0 0.0
        %1460 = vmatprep.subr.mxu0 0.0
        %1461 = vmatpush1.msra.mxu0 0.0
        %1462 = vmatprep.subr.mxu0 0.0
        %1463 = vmatpush1.msra.mxu0 0.0
        %1464 = vmatprep.subr.mxu0 0.0
        %1465 = vmatpush1.msra.mxu0 0.0
        %1466 = vmatprep.subr.mxu0 0.0
        %1467 = vmatpush1.msra.mxu0 0.0
        %1468 = vmatprep.subr.mxu0 0.0
        %1469 = vmatpush1.msra.mxu0 0.0
        %1470 = vmatprep.subr.mxu0 0.0
        %1471 = vmatpush1.msra.mxu0 0.0
        %1472 = vmatprep.subr.mxu0 0.0
        %1473 = vmatpush1.msra.mxu0 0.0
        %1474 = vmatprep.subr.mxu0 0.0
        %1475 = vmatpush1.msra.mxu0 0.0
        %1476 = vmatprep.subr.mxu0 0.0
        %1477 = vmatpush1.msra.mxu0 0.0
        %1478 = vmatprep.subr.mxu0 0.0
        %1479 = vmatpush1.msra.mxu0 0.0
        %1480 = vmatprep.subr.mxu0 0.0
        %1481 = vmatpush1.msra.mxu0 0.0
        %1482 = vmatprep.subr.mxu0 0.0
        %1483 = vmatpush1.msra.mxu0 0.0
        %1484 = vmatprep.subr.mxu0 0.0
        %1485 = vmatpush1.msra.mxu0 0.0
        %1486 = vmatprep.mubr.f32.mxu0 0.0
        %1487 = vmatmul.mubr.f32.gmra.mrb[0].mxu0 %v1421
        %v1488 = vpop.f32.mrb[0].mxu0
        %v1489 = vadd.f32 0.0, %v1488
        %v1490 = vpop.f32.mrb[0].mxu0
        %1491 = vdwg.mxu0
        %v1492 = vrcp.pop %v1489
        %v1493 = vmul.f32 %v1421, %v1492
        %v1494 = vmul.f32 %v461, %v1493
        %v1495 = vadd.f32 %v386, %v1494
        %v1496 = vmul.f32 %v536, %v1348
        %1497 = vmatprep.subr.mxu0 0.0
        %1498 = vmatpush1.msra.mxu0 %v280
        %1499 = vmatprep.subr.mxu0 0.0
        %1500 = vmatpush1.msra.mxu0 %v281
        %1501 = vmatprep.subr.mxu0 0.0
        %1502 = vmatpush1.msra.mxu0 %v282
        %1503 = vmatprep.subr.mxu0 0.0
        %1504 = vmatpush1.msra.mxu0 %v283
        %1505 = vmatprep.subr.mxu0 0.0
        %1506 = vmatpush1.msra.mxu0 %v284
        %1507 = vmatprep.subr.mxu0 0.0
        %1508 = vmatpush1.msra.mxu0 %v285
        %1509 = vmatprep.subr.mxu0 0.0
        %1510 = vmatpush1.msra.mxu0 %v286
        %1511 = vmatprep.subr.mxu0 0.0
        %1512 = vmatpush1.msra.mxu0 %v287
        %1513 = vmatprep.subr.mxu0 0.0
        %1514 = vmatpush1.msra.mxu0 %v288
        %1515 = vmatprep.subr.mxu0 0.0
        %1516 = vmatpush1.msra.mxu0 %v289
        %1517 = vmatprep.subr.mxu0 0.0
        %1518 = vmatpush1.msra.mxu0 %v290
        %1519 = vmatprep.subr.mxu0 0.0
        %1520 = vmatpush1.msra.mxu0 %v291
        %1521 = vmatprep.subr.mxu0 0.0
        %1522 = vmatpush1.msra.mxu0 %v292
        %1523 = vmatprep.subr.mxu0 0.0
        %1524 = vmatpush1.msra.mxu0 %v293
        %1525 = vmatprep.subr.mxu0 0.0
        %1526 = vmatpush1.msra.mxu0 %v294
        %1527 = vmatprep.subr.mxu0 0.0
        %1528 = vmatpush1.msra.mxu0 %v295
        %1529 = vmatprep.subr.mxu0 0.0
        %1530 = vmatpush1.msra.mxu0 0.0
        %1531 = vmatprep.subr.mxu0 0.0
        %1532 = vmatpush1.msra.mxu0 0.0
        %1533 = vmatprep.subr.mxu0 0.0
        %1534 = vmatpush1.msra.mxu0 0.0
        %1535 = vmatprep.subr.mxu0 0.0
        %1536 = vmatpush1.msra.mxu0 0.0
        %1537 = vmatprep.subr.mxu0 0.0
        %1538 = vmatpush1.msra.mxu0 0.0
        %1539 = vmatprep.subr.mxu0 0.0
        %1540 = vmatpush1.msra.mxu0 0.0
        %1541 = vmatprep.subr.mxu0 0.0
        %1542 = vmatpush1.msra.mxu0 0.0
        %1543 = vmatprep.subr.mxu0 0.0
        %1544 = vmatpush1.msra.mxu0 0.0
        %1545 = vmatprep.subr.mxu0 0.0
        %1546 = vmatpush1.msra.mxu0 0.0
        %1547 = vmatprep.subr.mxu0 0.0
        %1548 = vmatpush1.msra.mxu0 0.0
        %1549 = vmatprep.subr.mxu0 0.0
        %1550 = vmatpush1.msra.mxu0 0.0
        %1551 = vmatprep.subr.mxu0 0.0
        %1552 = vmatpush1.msra.mxu0 0.0
        %1553 = vmatprep.subr.mxu0 0.0
        %1554 = vmatpush1.msra.mxu0 0.0
        %1555 = vmatprep.subr.mxu0 0.0
        %1556 = vmatpush1.msra.mxu0 0.0
        %1557 = vmatprep.subr.mxu0 0.0
        %1558 = vmatpush1.msra.mxu0 0.0
        %1559 = vmatprep.subr.mxu0 0.0
        %1560 = vmatpush1.msra.mxu0 0.0
        %1561 = vmatprep.mubr.f32.mxu0 0.0
        %1562 = vmatmul.mubr.f32.gmra.mrb[0].mxu0 %v1496
        %v1563 = vpop.f32.mrb[0].mxu0
        %v1564 = vadd.f32 0.0, %v1563
        %v1565 = vpop.f32.mrb[0].mxu0
        %1566 = vdwg.mxu0
        %v1567 = vmul.f32 %v1564, 1.442695
        %v1568 = vpow.pop %v1567
        %1569 = vmatprep.subr.mxu0 0.0
        %1570 = vmatpush1.msra.mxu0 %v296
        %1571 = vmatprep.subr.mxu0 0.0
        %1572 = vmatpush1.msra.mxu0 %v297
        %1573 = vmatprep.subr.mxu0 0.0
        %1574 = vmatpush1.msra.mxu0 %v298
        %1575 = vmatprep.subr.mxu0 0.0
        %1576 = vmatpush1.msra.mxu0 %v299
        %1577 = vmatprep.subr.mxu0 0.0
        %1578 = vmatpush1.msra.mxu0 %v300
        %1579 = vmatprep.subr.mxu0 0.0
        %1580 = vmatpush1.msra.mxu0 %v301
        %1581 = vmatprep.subr.mxu0 0.0
        %1582 = vmatpush1.msra.mxu0 %v302
        %1583 = vmatprep.subr.mxu0 0.0
        %1584 = vmatpush1.msra.mxu0 %v303
        %1585 = vmatprep.subr.mxu0 0.0
        %1586 = vmatpush1.msra.mxu0 %v304
        %1587 = vmatprep.subr.mxu0 0.0
        %1588 = vmatpush1.msra.mxu0 %v305
        %1589 = vmatprep.subr.mxu0 0.0
        %1590 = vmatpush1.msra.mxu0 %v306
        %1591 = vmatprep.subr.mxu0 0.0
        %1592 = vmatpush1.msra.mxu0 %v307
        %1593 = vmatprep.subr.mxu0 0.0
        %1594 = vmatpush1.msra.mxu0 %v308
        %1595 = vmatprep.subr.mxu0 0.0
        %1596 = vmatpush1.msra.mxu0 %v309
        %1597 = vmatprep.subr.mxu0 0.0
        %1598 = vmatpush1.msra.mxu0 %v310
        %1599 = vmatprep.subr.mxu0 0.0
        %1600 = vmatpush1.msra.mxu0 %v311
        %1601 = vmatprep.subr.mxu0 0.0
        %1602 = vmatpush1.msra.mxu0 0.0
        %1603 = vmatprep.subr.mxu0 0.0
        %1604 = vmatpush1.msra.mxu0 0.0
        %1605 = vmatprep.subr.mxu0 0.0
        %1606 = vmatpush1.msra.mxu0 0.0
        %1607 = vmatprep.subr.mxu0 0.0
        %1608 = vmatpush1.msra.mxu0 0.0
        %1609 = vmatprep.subr.mxu0 0.0
        %1610 = vmatpush1.msra.mxu0 0.0
        %1611 = vmatprep.subr.mxu0 0.0
        %1612 = vmatpush1.msra.mxu0 0.0
        %1613 = vmatprep.subr.mxu0 0.0
        %1614 = vmatpush1.msra.mxu0 0.0
        %1615 = vmatprep.subr.mxu0 0.0
        %1616 = vmatpush1.msra.mxu0 0.0
        %1617 = vmatprep.subr.mxu0 0.0
        %1618 = vmatpush1.msra.mxu0 0.0
        %1619 = vmatprep.subr.mxu0 0.0
        %1620 = vmatpush1.msra.mxu0 0.0
        %1621 = vmatprep.subr.mxu0 0.0
        %1622 = vmatpush1.msra.mxu0 0.0
        %1623 = vmatprep.subr.mxu0 0.0
        %1624 = vmatpush1.msra.mxu0 0.0
        %1625 = vmatprep.subr.mxu0 0.0
        %1626 = vmatpush1.msra.mxu0 0.0
        %1627 = vmatprep.subr.mxu0 0.0
        %1628 = vmatpush1.msra.mxu0 0.0
        %1629 = vmatprep.subr.mxu0 0.0
        %1630 = vmatpush1.msra.mxu0 0.0
        %1631 = vmatprep.subr.mxu0 0.0
        %1632 = vmatpush1.msra.mxu0 0.0
        %1633 = vmatprep.mubr.f32.mxu0 0.0
        %1634 = vmatmul.mubr.f32.gmra.mrb[0].mxu0 %v1568
        %v1635 = vpop.f32.mrb[0].mxu0
        %v1636 = vadd.f32 0.0, %v1635
        %v1637 = vpop.f32.mrb[0].mxu0
        %1638 = vdwg.mxu0
        %v1639 = vrcp.pop %v1636
        %v1640 = vmul.f32 %v1568, %v1639
        %v1641 = vmul.f32 %v536, %v1640
        %v1642 = vadd.f32 %v1495, %v1641
        %v1643 = vmul.f32 %v611, %v1348
        %1644 = vmatprep.subr.mxu0 0.0
        %1645 = vmatpush1.msra.mxu0 %v280
        %1646 = vmatprep.subr.mxu0 0.0
        %1647 = vmatpush1.msra.mxu0 %v281
        %1648 = vmatprep.subr.mxu0 0.0
        %1649 = vmatpush1.msra.mxu0 %v282
        %1650 = vmatprep.subr.mxu0 0.0
        %1651 = vmatpush1.msra.mxu0 %v283
        %1652 = vmatprep.subr.mxu0 0.0
        %1653 = vmatpush1.msra.mxu0 %v284
        %1654 = vmatprep.subr.mxu0 0.0
        %1655 = vmatpush1.msra.mxu0 %v285
        %1656 = vmatprep.subr.mxu0 0.0
        %1657 = vmatpush1.msra.mxu0 %v286
        %1658 = vmatprep.subr.mxu0 0.0
        %1659 = vmatpush1.msra.mxu0 %v287
        %1660 = vmatprep.subr.mxu0 0.0
        %1661 = vmatpush1.msra.mxu0 %v288
        %1662 = vmatprep.subr.mxu0 0.0
        %1663 = vmatpush1.msra.mxu0 %v289
        %1664 = vmatprep.subr.mxu0 0.0
        %1665 = vmatpush1.msra.mxu0 %v290
        %1666 = vmatprep.subr.mxu0 0.0
        %1667 = vmatpush1.msra.mxu0 %v291
        %1668 = vmatprep.subr.mxu0 0.0
        %1669 = vmatpush1.msra.mxu0 %v292
        %1670 = vmatprep.subr.mxu0 0.0
        %1671 = vmatpush1.msra.mxu0 %v293
        %1672 = vmatprep.subr.mxu0 0.0
        %1673 = vmatpush1.msra.mxu0 %v294
        %1674 = vmatprep.subr.mxu0 0.0
        %1675 = vmatpush1.msra.mxu0 %v295
        %1676 = vmatprep.subr.mxu0 0.0
        %1677 = vmatpush1.msra.mxu0 0.0
        %1678 = vmatprep.subr.mxu0 0.0
        %1679 = vmatpush1.msra.mxu0 0.0
        %1680 = vmatprep.subr.mxu0 0.0
        %1681 = vmatpush1.msra.mxu0 0.0
        %1682 = vmatprep.subr.mxu0 0.0
        %1683 = vmatpush1.msra.mxu0 0.0
        %1684 = vmatprep.subr.mxu0 0.0
        %1685 = vmatpush1.msra.mxu0 0.0
        %1686 = vmatprep.subr.mxu0 0.0
        %1687 = vmatpush1.msra.mxu0 0.0
        %1688 = vmatprep.subr.mxu0 0.0
        %1689 = vmatpush1.msra.mxu0 0.0
        %1690 = vmatprep.subr.mxu0 0.0
        %1691 = vmatpush1.msra.mxu0 0.0
        %1692 = vmatprep.subr.mxu0 0.0
        %1693 = vmatpush1.msra.mxu0 0.0
        %1694 = vmatprep.subr.mxu0 0.0
        %1695 = vmatpush1.msra.mxu0 0.0
        %1696 = vmatprep.subr.mxu0 0.0
        %1697 = vmatpush1.msra.mxu0 0.0
        %1698 = vmatprep.subr.mxu0 0.0
        %1699 = vmatpush1.msra.mxu0 0.0
        %1700 = vmatprep.subr.mxu0 0.0
        %1701 = vmatpush1.msra.mxu0 0.0
        %1702 = vmatprep.subr.mxu0 0.0
        %1703 = vmatpush1.msra.mxu0 0.0
        %1704 = vmatprep.subr.mxu0 0.0
        %1705 = vmatpush1.msra.mxu0 0.0
        %1706 = vmatprep.subr.mxu0 0.0
        %1707 = vmatpush1.msra.mxu0 0.0
        %1708 = vmatprep.mubr.f32.mxu0 0.0
        %1709 = vmatmul.mubr.f32.gmra.mrb[0].mxu0 %v1643
        %v1710 = vpop.f32.mrb[0].mxu0
        %v1711 = vadd.f32 0.0, %v1710
        %v1712 = vpop.f32.mrb[0].mxu0
        %1713 = vdwg.mxu0
        %v1714 = vmul.f32 %v1711, 1.442695
        %v1715 = vpow.pop %v1714
        %1716 = vmatprep.subr.mxu0 0.0
        %1717 = vmatpush1.msra.mxu0 %v296
        %1718 = vmatprep.subr.mxu0 0.0
        %1719 = vmatpush1.msra.mxu0 %v297
        %1720 = vmatprep.subr.mxu0 0.0
        %1721 = vmatpush1.msra.mxu0 %v298
        %1722 = vmatprep.subr.mxu0 0.0
        %1723 = vmatpush1.msra.mxu0 %v299
        %1724 = vmatprep.subr.mxu0 0.0
        %1725 = vmatpush1.msra.mxu0 %v300
        %1726 = vmatprep.subr.mxu0 0.0
        %1727 = vmatpush1.msra.mxu0 %v301
        %1728 = vmatprep.subr.mxu0 0.0
        %1729 = vmatpush1.msra.mxu0 %v302
        %1730 = vmatprep.subr.mxu0 0.0
        %1731 = vmatpush1.msra.mxu0 %v303
        %1732 = vmatprep.subr.mxu0 0.0
        %1733 = vmatpush1.msra.mxu0 %v304
        %1734 = vmatprep.subr.mxu0 0.0
        %1735 = vmatpush1.msra.mxu0 %v305
        %1736 = vmatprep.subr.mxu0 0.0
        %1737 = vmatpush1.msra.mxu0 %v306
        %1738 = vmatprep.subr.mxu0 0.0
        %1739 = vmatpush1.msra.mxu0 %v307
        %1740 = vmatprep.subr.mxu0 0.0
        %1741 = vmatpush1.msra.mxu0 %v308
        %1742 = vmatprep.subr.mxu0 0.0
        %1743 = vmatpush1.msra.mxu0 %v309
        %1744 = vmatprep.subr.mxu0 0.0
        %1745 = vmatpush1.msra.mxu0 %v310
        %1746 = vmatprep.subr.mxu0 0.0
        %1747 = vmatpush1.msra.mxu0 %v311
        %1748 = vmatprep.subr.mxu0 0.0
        %1749 = vmatpush1.msra.mxu0 0.0
        %1750 = vmatprep.subr.mxu0 0.0
        %1751 = vmatpush1.msra.mxu0 0.0
        %1752 = vmatprep.subr.mxu0 0.0
        %1753 = vmatpush1.msra.mxu0 0.0
        %1754 = vmatprep.subr.mxu0 0.0
        %1755 = vmatpush1.msra.mxu0 0.0
        %1756 = vmatprep.subr.mxu0 0.0
        %1757 = vmatpush1.msra.mxu0 0.0
        %1758 = vmatprep.subr.mxu0 0.0
        %1759 = vmatpush1.msra.mxu0 0.0
        %1760 = vmatprep.subr.mxu0 0.0
        %1761 = vmatpush1.msra.mxu0 0.0
        %1762 = vmatprep.subr.mxu0 0.0
        %1763 = vmatpush1.msra.mxu0 0.0
        %1764 = vmatprep.subr.mxu0 0.0
        %1765 = vmatpush1.msra.mxu0 0.0
        %1766 = vmatprep.subr.mxu0 0.0
        %1767 = vmatpush1.msra.mxu0 0.0
        %1768 = vmatprep.subr.mxu0 0.0
        %1769 = vmatpush1.msra.mxu0 0.0
        %1770 = vmatprep.subr.mxu0 0.0
        %1771 = vmatpush1.msra.mxu0 0.0
        %1772 = vmatprep.subr.mxu0 0.0
        %1773 = vmatpush1.msra.mxu0 0.0
        %1774 = vmatprep.subr.mxu0 0.0
        %1775 = vmatpush1.msra.mxu0 0.0
        %1776 = vmatprep.subr.mxu0 0.0
        %1777 = vmatpush1.msra.mxu0 0.0
        %1778 = vmatprep.subr.mxu0 0.0
        %1779 = vmatpush1.msra.mxu0 0.0
        %1780 = vmatprep.mubr.f32.mxu0 0.0
        %1781 = vmatmul.mubr.f32.gmra.mrb[0].mxu0 %v1715
        %v1782 = vpop.f32.mrb[0].mxu0
        %v1783 = vadd.f32 0.0, %v1782
        %v1784 = vpop.f32.mrb[0].mxu0
        %1785 = vdwg.mxu0
        %v1786 = vrcp.pop %v1783
        %v1787 = vmul.f32 %v1715, %v1786
        %v1788 = vmul.f32 %v611, %v1787
        %v1789 = vadd.f32 %v1642, %v1788
        %v1790 = vmul.f32 %v686, %v1348
        %1791 = vmatprep.subr.mxu0 0.0
        %1792 = vmatpush1.msra.mxu0 %v280
        %1793 = vmatprep.subr.mxu0 0.0
        %1794 = vmatpush1.msra.mxu0 %v281
        %1795 = vmatprep.subr.mxu0 0.0
        %1796 = vmatpush1.msra.mxu0 %v282
        %1797 = vmatprep.subr.mxu0 0.0
        %1798 = vmatpush1.msra.mxu0 %v283
        %1799 = vmatprep.subr.mxu0 0.0
        %1800 = vmatpush1.msra.mxu0 %v284
        %1801 = vmatprep.subr.mxu0 0.0
        %1802 = vmatpush1.msra.mxu0 %v285
        %1803 = vmatprep.subr.mxu0 0.0
        %1804 = vmatpush1.msra.mxu0 %v286
        %1805 = vmatprep.subr.mxu0 0.0
        %1806 = vmatpush1.msra.mxu0 %v287
        %1807 = vmatprep.subr.mxu0 0.0
        %1808 = vmatpush1.msra.mxu0 %v288
        %1809 = vmatprep.subr.mxu0 0.0
        %1810 = vmatpush1.msra.mxu0 %v289
        %1811 = vmatprep.subr.mxu0 0.0
        %1812 = vmatpush1.msra.mxu0 %v290
        %1813 = vmatprep.subr.mxu0 0.0
        %1814 = vmatpush1.msra.mxu0 %v291
        %1815 = vmatprep.subr.mxu0 0.0
        %1816 = vmatpush1.msra.mxu0 %v292
        %1817 = vmatprep.subr.mxu0 0.0
        %1818 = vmatpush1.msra.mxu0 %v293
        %1819 = vmatprep.subr.mxu0 0.0
        %1820 = vmatpush1.msra.mxu0 %v294
        %1821 = vmatprep.subr.mxu0 0.0
        %1822 = vmatpush1.msra.mxu0 %v295
        %1823 = vmatprep.subr.mxu0 0.0
        %1824 = vmatpush1.msra.mxu0 0.0
        %1825 = vmatprep.subr.mxu0 0.0
        %1826 = vmatpush1.msra.mxu0 0.0
        %1827 = vmatprep.subr.mxu0 0.0
        %1828 = vmatpush1.msra.mxu0 0.0
        %1829 = vmatprep.subr.mxu0 0.0
        %1830 = vmatpush1.msra.mxu0 0.0
        %1831 = vmatprep.subr.mxu0 0.0
        %1832 = vmatpush1.msra.mxu0 0.0
        %1833 = vmatprep.subr.mxu0 0.0
        %1834 = vmatpush1.msra.mxu0 0.0
        %1835 = vmatprep.subr.mxu0 0.0
        %1836 = vmatpush1.msra.mxu0 0.0
        %1837 = vmatprep.subr.mxu0 0.0
        %1838 = vmatpush1.msra.mxu0 0.0
        %1839 = vmatprep.subr.mxu0 0.0
        %1840 = vmatpush1.msra.mxu0 0.0
        %1841 = vmatprep.subr.mxu0 0.0
        %1842 = vmatpush1.msra.mxu0 0.0
        %1843 = vmatprep.subr.mxu0 0.0
        %1844 = vmatpush1.msra.mxu0 0.0
        %1845 = vmatprep.subr.mxu0 0.0
        %1846 = vmatpush1.msra.mxu0 0.0
        %1847 = vmatprep.subr.mxu0 0.0
        %1848 = vmatpush1.msra.mxu0 0.0
        %1849 = vmatprep.subr.mxu0 0.0
        %1850 = vmatpush1.msra.mxu0 0.0
        %1851 = vmatprep.subr.mxu0 0.0
        %1852 = vmatpush1.msra.mxu0 0.0
        %1853 = vmatprep.subr.mxu0 0.0
        %1854 = vmatpush1.msra.mxu0 0.0
        %1855 = vmatprep.mubr.f32.mxu0 0.0
        %1856 = vmatmul.mubr.f32.gmra.mrb[0].mxu0 %v1790
        %v1857 = vpop.f32.mrb[0].mxu0
        %v1858 = vadd.f32 0.0, %v1857
        %v1859 = vpop.f32.mrb[0].mxu0
        %1860 = vdwg.mxu0
        %v1861 = vmul.f32 %v1858, 1.442695
        %v1862 = vpow.pop %v1861
        %1863 = vmatprep.subr.mxu0 0.0
        %1864 = vmatpush1.msra.mxu0 %v296
        %1865 = vmatprep.subr.mxu0 0.0
        %1866 = vmatpush1.msra.mxu0 %v297
        %1867 = vmatprep.subr.mxu0 0.0
        %1868 = vmatpush1.msra.mxu0 %v298
        %1869 = vmatprep.subr.mxu0 0.0
        %1870 = vmatpush1.msra.mxu0 %v299
        %1871 = vmatprep.subr.mxu0 0.0
        %1872 = vmatpush1.msra.mxu0 %v300
        %1873 = vmatprep.subr.mxu0 0.0
        %1874 = vmatpush1.msra.mxu0 %v301
        %1875 = vmatprep.subr.mxu0 0.0
        %1876 = vmatpush1.msra.mxu0 %v302
        %1877 = vmatprep.subr.mxu0 0.0
        %1878 = vmatpush1.msra.mxu0 %v303
        %1879 = vmatprep.subr.mxu0 0.0
        %1880 = vmatpush1.msra.mxu0 %v304
        %1881 = vmatprep.subr.mxu0 0.0
        %1882 = vmatpush1.msra.mxu0 %v305
        %1883 = vmatprep.subr.mxu0 0.0
        %1884 = vmatpush1.msra.mxu0 %v306
        %1885 = vmatprep.subr.mxu0 0.0
        %1886 = vmatpush1.msra.mxu0 %v307
        %1887 = vmatprep.subr.mxu0 0.0
        %1888 = vmatpush1.msra.mxu0 %v308
        %1889 = vmatprep.subr.mxu0 0.0
        %1890 = vmatpush1.msra.mxu0 %v309
        %1891 = vmatprep.subr.mxu0 0.0
        %1892 = vmatpush1.msra.mxu0 %v310
        %1893 = vmatprep.subr.mxu0 0.0
        %1894 = vmatpush1.msra.mxu0 %v311
        %1895 = vmatprep.subr.mxu0 0.0
        %1896 = vmatpush1.msra.mxu0 0.0
        %1897 = vmatprep.subr.mxu0 0.0
        %1898 = vmatpush1.msra.mxu0 0.0
        %1899 = vmatprep.subr.mxu0 0.0
        %1900 = vmatpush1.msra.mxu0 0.0
        %1901 = vmatprep.subr.mxu0 0.0
        %1902 = vmatpush1.msra.mxu0 0.0
        %1903 = vmatprep.subr.mxu0 0.0
        %1904 = vmatpush1.msra.mxu0 0.0
        %1905 = vmatprep.subr.mxu0 0.0
        %1906 = vmatpush1.msra.mxu0 0.0
        %1907 = vmatprep.subr.mxu0 0.0
        %1908 = vmatpush1.msra.mxu0 0.0
        %1909 = vmatprep.subr.mxu0 0.0
        %1910 = vmatpush1.msra.mxu0 0.0
        %1911 = vmatprep.subr.mxu0 0.0
        %1912 = vmatpush1.msra.mxu0 0.0
        %1913 = vmatprep.subr.mxu0 0.0
        %1914 = vmatpush1.msra.mxu0 0.0
        %1915 = vmatprep.subr.mxu0 0.0
        %1916 = vmatpush1.msra.mxu0 0.0
        %1917 = vmatprep.subr.mxu0 0.0
        %1918 = vmatpush1.msra.mxu0 0.0
        %1919 = vmatprep.subr.mxu0 0.0
        %1920 = vmatpush1.msra.mxu0 0.0
        %1921 = vmatprep.subr.mxu0 0.0
        %1922 = vmatpush1.msra.mxu0 0.0
        %1923 = vmatprep.subr.mxu0 0.0
        %1924 = vmatpush1.msra.mxu0 0.0
        %1925 = vmatprep.subr.mxu0 0.0
        %1926 = vmatpush1.msra.mxu0 0.0
        %1927 = vmatprep.mubr.f32.mxu0 0.0
        %1928 = vmatmul.mubr.f32.gmra.mrb[0].mxu0 %v1862
        %v1929 = vpop.f32.mrb[0].mxu0
        %v1930 = vadd.f32 0.0, %v1929
        %v1931 = vpop.f32.mrb[0].mxu0
        %1932 = vdwg.mxu0
        %v1933 = vrcp.pop %v1930
        %v1934 = vmul.f32 %v1862, %v1933
        %v1935 = vmul.f32 %v686, %v1934
        %v1936 = vadd.f32 %v1789, %v1935
        %v1937 = vmul.f32 %v1936, %v1936
        %1938 = vmatprep.subr.mxu0 0.0
        %1939 = vmatpush1.msra.mxu0 %v280
        %1940 = vmatprep.subr.mxu0 0.0
        %1941 = vmatpush1.msra.mxu0 %v281
        %1942 = vmatprep.subr.mxu0 0.0
        %1943 = vmatpush1.msra.mxu0 %v282
        %1944 = vmatprep.subr.mxu0 0.0
        %1945 = vmatpush1.msra.mxu0 %v283
        %1946 = vmatprep.subr.mxu0 0.0
        %1947 = vmatpush1.msra.mxu0 %v284
        %1948 = vmatprep.subr.mxu0 0.0
        %1949 = vmatpush1.msra.mxu0 %v285
        %1950 = vmatprep.subr.mxu0 0.0
        %1951 = vmatpush1.msra.mxu0 %v286
        %1952 = vmatprep.subr.mxu0 0.0
        %1953 = vmatpush1.msra.mxu0 %v287
        %1954 = vmatprep.subr.mxu0 0.0
        %1955 = vmatpush1.msra.mxu0 %v288
        %1956 = vmatprep.subr.mxu0 0.0
        %1957 = vmatpush1.msra.mxu0 %v289
        %1958 = vmatprep.subr.mxu0 0.0
        %1959 = vmatpush1.msra.mxu0 %v290
        %1960 = vmatprep.subr.mxu0 0.0
        %1961 = vmatpush1.msra.mxu0 %v291
        %1962 = vmatprep.subr.mxu0 0.0
        %1963 = vmatpush1.msra.mxu0 %v292
        %1964 = vmatprep.subr.mxu0 0.0
        %1965 = vmatpush1.msra.mxu0 %v293
        %1966 = vmatprep.subr.mxu0 0.0
        %1967 = vmatpush1.msra.mxu0 %v294
        %1968 = vmatprep.subr.mxu0 0.0
        %1969 = vmatpush1.msra.mxu0 %v295
        %1970 = vmatprep.subr.mxu0 0.0
        %1971 = vmatpush1.msra.mxu0 0.0
        %1972 = vmatprep.subr.mxu0 0.0
        %1973 = vmatpush1.msra.mxu0 0.0
        %1974 = vmatprep.subr.mxu0 0.0
        %1975 = vmatpush1.msra.mxu0 0.0
        %1976 = vmatprep.subr.mxu0 0.0
        %1977 = vmatpush1.msra.mxu0 0.0
        %1978 = vmatprep.subr.mxu0 0.0
        %1979 = vmatpush1.msra.mxu0 0.0
        %1980 = vmatprep.subr.mxu0 0.0
        %1981 = vmatpush1.msra.mxu0 0.0
        %1982 = vmatprep.subr.mxu0 0.0
        %1983 = vmatpush1.msra.mxu0 0.0
        %1984 = vmatprep.subr.mxu0 0.0
        %1985 = vmatpush1.msra.mxu0 0.0
        %1986 = vmatprep.subr.mxu0 0.0
        %1987 = vmatpush1.msra.mxu0 0.0
        %1988 = vmatprep.subr.mxu0 0.0
        %1989 = vmatpush1.msra.mxu0 0.0
        %1990 = vmatprep.subr.mxu0 0.0
        %1991 = vmatpush1.msra.mxu0 0.0
        %1992 = vmatprep.subr.mxu0 0.0
        %1993 = vmatpush1.msra.mxu0 0.0
        %1994 = vmatprep.subr.mxu0 0.0
        %1995 = vmatpush1.msra.mxu0 0.0
        %1996 = vmatprep.subr.mxu0 0.0
        %1997 = vmatpush1.msra.mxu0 0.0
        %1998 = vmatprep.subr.mxu0 0.0
        %1999 = vmatpush1.msra.mxu0 0.0
        %2000 = vmatprep.subr.mxu0 0.0
        %2001 = vmatpush1.msra.mxu0 0.0
        %2002 = vmatprep.mubr.f32.mxu0 0.0
        %2003 = vmatmul.mubr.f32.gmra.mrb[0].mxu0 %v1937
        %v2004 = vpop.f32.mrb[0].mxu0
        %v2005 = vadd.f32 0.0, %v2004
        %v2006 = vpop.f32.mrb[0].mxu0
        %2007 = vdwg.mxu0
        %v2008 = vmax.f32 %v2005, 1e-24
        %v2009 = vrsqrt.pop %v2008
        %v2010 = vmul.f32 %v1936, %v2009
        %v2011 = vmul.f32 %v461, %v2010
        %2012 = vmatprep.subr.mxu0 0.0
        %2013 = vmatpush1.msra.mxu0 %v280
        %2014 = vmatprep.subr.mxu0 0.0
        %2015 = vmatpush1.msra.mxu0 %v281
        %2016 = vmatprep.subr.mxu0 0.0
        %2017 = vmatpush1.msra.mxu0 %v282
        %2018 = vmatprep.subr.mxu0 0.0
        %2019 = vmatpush1.msra.mxu0 %v283
        %2020 = vmatprep.subr.mxu0 0.0
        %2021 = vmatpush1.msra.mxu0 %v284
        %2022 = vmatprep.subr.mxu0 0.0
        %2023 = vmatpush1.msra.mxu0 %v285
        %2024 = vmatprep.subr.mxu0 0.0
        %2025 = vmatpush1.msra.mxu0 %v286
        %2026 = vmatprep.subr.mxu0 0.0
        %2027 = vmatpush1.msra.mxu0 %v287
        %2028 = vmatprep.subr.mxu0 0.0
        %2029 = vmatpush1.msra.mxu0 %v288
        %2030 = vmatprep.subr.mxu0 0.0
        %2031 = vmatpush1.msra.mxu0 %v289
        %2032 = vmatprep.subr.mxu0 0.0
        %2033 = vmatpush1.msra.mxu0 %v290
        %2034 = vmatprep.subr.mxu0 0.0
        %2035 = vmatpush1.msra.mxu0 %v291
        %2036 = vmatprep.subr.mxu0 0.0
        %2037 = vmatpush1.msra.mxu0 %v292
        %2038 = vmatprep.subr.mxu0 0.0
        %2039 = vmatpush1.msra.mxu0 %v293
        %2040 = vmatprep.subr.mxu0 0.0
        %2041 = vmatpush1.msra.mxu0 %v294
        %2042 = vmatprep.subr.mxu0 0.0
        %2043 = vmatpush1.msra.mxu0 %v295
        %2044 = vmatprep.subr.mxu0 0.0
        %2045 = vmatpush1.msra.mxu0 0.0
        %2046 = vmatprep.subr.mxu0 0.0
        %2047 = vmatpush1.msra.mxu0 0.0
        %2048 = vmatprep.subr.mxu0 0.0
        %2049 = vmatpush1.msra.mxu0 0.0
        %2050 = vmatprep.subr.mxu0 0.0
        %2051 = vmatpush1.msra.mxu0 0.0
        %2052 = vmatprep.subr.mxu0 0.0
        %2053 = vmatpush1.msra.mxu0 0.0
        %2054 = vmatprep.subr.mxu0 0.0
        %2055 = vmatpush1.msra.mxu0 0.0
        %2056 = vmatprep.subr.mxu0 0.0
        %2057 = vmatpush1.msra.mxu0 0.0
        %2058 = vmatprep.subr.mxu0 0.0
        %2059 = vmatpush1.msra.mxu0 0.0
        %2060 = vmatprep.subr.mxu0 0.0
        %2061 = vmatpush1.msra.mxu0 0.0
        %2062 = vmatprep.subr.mxu0 0.0
        %2063 = vmatpush1.msra.mxu0 0.0
        %2064 = vmatprep.subr.mxu0 0.0
        %2065 = vmatpush1.msra.mxu0 0.0
        %2066 = vmatprep.subr.mxu0 0.0
        %2067 = vmatpush1.msra.mxu0 0.0
        %2068 = vmatprep.subr.mxu0 0.0
        %2069 = vmatpush1.msra.mxu0 0.0
        %2070 = vmatprep.subr.mxu0 0.0
        %2071 = vmatpush1.msra.mxu0 0.0
        %2072 = vmatprep.subr.mxu0 0.0
        %2073 = vmatpush1.msra.mxu0 0.0
        %2074 = vmatprep.subr.mxu0 0.0
        %2075 = vmatpush1.msra.mxu0 0.0
        %2076 = vmatprep.mubr.f32.mxu0 0.0
        %2077 = vmatmul.mubr.f32.gmra.mrb[0].mxu0 %v2011
        %v2078 = vpop.f32.mrb[0].mxu0
        %v2079 = vadd.f32 0.0, %v2078
        %v2080 = vpop.f32.mrb[0].mxu0
        %2081 = vdwg.mxu0
        %v2082 = vmul.f32 %v2079, 1.442695
        %v2083 = vpow.pop %v2082
        %2084 = vmatprep.subr.mxu0 0.0
        %2085 = vmatpush1.msra.mxu0 %v296
        %2086 = vmatprep.subr.mxu0 0.0
        %2087 = vmatpush1.msra.mxu0 %v297
        %2088 = vmatprep.subr.mxu0 0.0
        %2089 = vmatpush1.msra.mxu0 %v298
        %2090 = vmatprep.subr.mxu0 0.0
        %2091 = vmatpush1.msra.mxu0 %v299
        %2092 = vmatprep.subr.mxu0 0.0
        %2093 = vmatpush1.msra.mxu0 %v300
        %2094 = vmatprep.subr.mxu0 0.0
        %2095 = vmatpush1.msra.mxu0 %v301
        %2096 = vmatprep.subr.mxu0 0.0
        %2097 = vmatpush1.msra.mxu0 %v302
        %2098 = vmatprep.subr.mxu0 0.0
        %2099 = vmatpush1.msra.mxu0 %v303
        %2100 = vmatprep.subr.mxu0 0.0
        %2101 = vmatpush1.msra.mxu0 %v304
        %2102 = vmatprep.subr.mxu0 0.0
        %2103 = vmatpush1.msra.mxu0 %v305
        %2104 = vmatprep.subr.mxu0 0.0
        %2105 = vmatpush1.msra.mxu0 %v306
        %2106 = vmatprep.subr.mxu0 0.0
        %2107 = vmatpush1.msra.mxu0 %v307
        %2108 = vmatprep.subr.mxu0 0.0
        %2109 = vmatpush1.msra.mxu0 %v308
        %2110 = vmatprep.subr.mxu0 0.0
        %2111 = vmatpush1.msra.mxu0 %v309
        %2112 = vmatprep.subr.mxu0 0.0
        %2113 = vmatpush1.msra.mxu0 %v310
        %2114 = vmatprep.subr.mxu0 0.0
        %2115 = vmatpush1.msra.mxu0 %v311
        %2116 = vmatprep.subr.mxu0 0.0
        %2117 = vmatpush1.msra.mxu0 0.0
        %2118 = vmatprep.subr.mxu0 0.0
        %2119 = vmatpush1.msra.mxu0 0.0
        %2120 = vmatprep.subr.mxu0 0.0
        %2121 = vmatpush1.msra.mxu0 0.0
        %2122 = vmatprep.subr.mxu0 0.0
        %2123 = vmatpush1.msra.mxu0 0.0
        %2124 = vmatprep.subr.mxu0 0.0
        %2125 = vmatpush1.msra.mxu0 0.0
        %2126 = vmatprep.subr.mxu0 0.0
        %2127 = vmatpush1.msra.mxu0 0.0
        %2128 = vmatprep.subr.mxu0 0.0
        %2129 = vmatpush1.msra.mxu0 0.0
        %2130 = vmatprep.subr.mxu0 0.0
        %2131 = vmatpush1.msra.mxu0 0.0
        %2132 = vmatprep.subr.mxu0 0.0
        %2133 = vmatpush1.msra.mxu0 0.0
        %2134 = vmatprep.subr.mxu0 0.0
        %2135 = vmatpush1.msra.mxu0 0.0
        %2136 = vmatprep.subr.mxu0 0.0
        %2137 = vmatpush1.msra.mxu0 0.0
        %2138 = vmatprep.subr.mxu0 0.0
        %2139 = vmatpush1.msra.mxu0 0.0
        %2140 = vmatprep.subr.mxu0 0.0
        %2141 = vmatpush1.msra.mxu0 0.0
        %2142 = vmatprep.subr.mxu0 0.0
        %2143 = vmatpush1.msra.mxu0 0.0
        %2144 = vmatprep.subr.mxu0 0.0
        %2145 = vmatpush1.msra.mxu0 0.0
        %2146 = vmatprep.subr.mxu0 0.0
        %2147 = vmatpush1.msra.mxu0 0.0
        %2148 = vmatprep.mubr.f32.mxu0 0.0
        %2149 = vmatmul.mubr.f32.gmra.mrb[0].mxu0 %v2083
        %v2150 = vpop.f32.mrb[0].mxu0
        %v2151 = vadd.f32 0.0, %v2150
        %v2152 = vpop.f32.mrb[0].mxu0
        %2153 = vdwg.mxu0
        %v2154 = vrcp.pop %v2151
        %v2155 = vmul.f32 %v2083, %v2154
        %v2156 = vmul.f32 %v461, %v2155
        %v2157 = vadd.f32 %v386, %v2156
        %v2158 = vmul.f32 %v536, %v2010
        %2159 = vmatprep.subr.mxu0 0.0
        %2160 = vmatpush1.msra.mxu0 %v280
        %2161 = vmatprep.subr.mxu0 0.0
        %2162 = vmatpush1.msra.mxu0 %v281
        %2163 = vmatprep.subr.mxu0 0.0
        %2164 = vmatpush1.msra.mxu0 %v282
        %2165 = vmatprep.subr.mxu0 0.0
        %2166 = vmatpush1.msra.mxu0 %v283
        %2167 = vmatprep.subr.mxu0 0.0
        %2168 = vmatpush1.msra.mxu0 %v284
        %2169 = vmatprep.subr.mxu0 0.0
        %2170 = vmatpush1.msra.mxu0 %v285
        %2171 = vmatprep.subr.mxu0 0.0
        %2172 = vmatpush1.msra.mxu0 %v286
        %2173 = vmatprep.subr.mxu0 0.0
        %2174 = vmatpush1.msra.mxu0 %v287
        %2175 = vmatprep.subr.mxu0 0.0
        %2176 = vmatpush1.msra.mxu0 %v288
        %2177 = vmatprep.subr.mxu0 0.0
        %2178 = vmatpush1.msra.mxu0 %v289
        %2179 = vmatprep.subr.mxu0 0.0
        %2180 = vmatpush1.msra.mxu0 %v290
        %2181 = vmatprep.subr.mxu0 0.0
        %2182 = vmatpush1.msra.mxu0 %v291
        %2183 = vmatprep.subr.mxu0 0.0
        %2184 = vmatpush1.msra.mxu0 %v292
        %2185 = vmatprep.subr.mxu0 0.0
        %2186 = vmatpush1.msra.mxu0 %v293
        %2187 = vmatprep.subr.mxu0 0.0
        %2188 = vmatpush1.msra.mxu0 %v294
        %2189 = vmatprep.subr.mxu0 0.0
        %2190 = vmatpush1.msra.mxu0 %v295
        %2191 = vmatprep.subr.mxu0 0.0
        %2192 = vmatpush1.msra.mxu0 0.0
        %2193 = vmatprep.subr.mxu0 0.0
        %2194 = vmatpush1.msra.mxu0 0.0
        %2195 = vmatprep.subr.mxu0 0.0
        %2196 = vmatpush1.msra.mxu0 0.0
        %2197 = vmatprep.subr.mxu0 0.0
        %2198 = vmatpush1.msra.mxu0 0.0
        %2199 = vmatprep.subr.mxu0 0.0
        %2200 = vmatpush1.msra.mxu0 0.0
        %2201 = vmatprep.subr.mxu0 0.0
        %2202 = vmatpush1.msra.mxu0 0.0
        %2203 = vmatprep.subr.mxu0 0.0
        %2204 = vmatpush1.msra.mxu0 0.0
        %2205 = vmatprep.subr.mxu0 0.0
        %2206 = vmatpush1.msra.mxu0 0.0
        %2207 = vmatprep.subr.mxu0 0.0
        %2208 = vmatpush1.msra.mxu0 0.0
        %2209 = vmatprep.subr.mxu0 0.0
        %2210 = vmatpush1.msra.mxu0 0.0
        %2211 = vmatprep.subr.mxu0 0.0
        %2212 = vmatpush1.msra.mxu0 0.0
        %2213 = vmatprep.subr.mxu0 0.0
        %2214 = vmatpush1.msra.mxu0 0.0
        %2215 = vmatprep.subr.mxu0 0.0
        %2216 = vmatpush1.msra.mxu0 0.0
        %2217 = vmatprep.subr.mxu0 0.0
        %2218 = vmatpush1.msra.mxu0 0.0
        %2219 = vmatprep.subr.mxu0 0.0
        %2220 = vmatpush1.msra.mxu0 0.0
        %2221 = vmatprep.subr.mxu0 0.0
        %2222 = vmatpush1.msra.mxu0 0.0
        %2223 = vmatprep.mubr.f32.mxu0 0.0
        %2224 = vmatmul.mubr.f32.gmra.mrb[0].mxu0 %v2158
        %v2225 = vpop.f32.mrb[0].mxu0
        %v2226 = vadd.f32 0.0, %v2225
        %v2227 = vpop.f32.mrb[0].mxu0
        %2228 = vdwg.mxu0
        %v2229 = vmul.f32 %v2226, 1.442695
        %v2230 = vpow.pop %v2229
        %2231 = vmatprep.subr.mxu0 0.0
        %2232 = vmatpush1.msra.mxu0 %v296
        %2233 = vmatprep.subr.mxu0 0.0
        %2234 = vmatpush1.msra.mxu0 %v297
        %2235 = vmatprep.subr.mxu0 0.0
        %2236 = vmatpush1.msra.mxu0 %v298
        %2237 = vmatprep.subr.mxu0 0.0
        %2238 = vmatpush1.msra.mxu0 %v299
        %2239 = vmatprep.subr.mxu0 0.0
        %2240 = vmatpush1.msra.mxu0 %v300
        %2241 = vmatprep.subr.mxu0 0.0
        %2242 = vmatpush1.msra.mxu0 %v301
        %2243 = vmatprep.subr.mxu0 0.0
        %2244 = vmatpush1.msra.mxu0 %v302
        %2245 = vmatprep.subr.mxu0 0.0
        %2246 = vmatpush1.msra.mxu0 %v303
        %2247 = vmatprep.subr.mxu0 0.0
        %2248 = vmatpush1.msra.mxu0 %v304
        %2249 = vmatprep.subr.mxu0 0.0
        %2250 = vmatpush1.msra.mxu0 %v305
        %2251 = vmatprep.subr.mxu0 0.0
        %2252 = vmatpush1.msra.mxu0 %v306
        %2253 = vmatprep.subr.mxu0 0.0
        %2254 = vmatpush1.msra.mxu0 %v307
        %2255 = vmatprep.subr.mxu0 0.0
        %2256 = vmatpush1.msra.mxu0 %v308
        %2257 = vmatprep.subr.mxu0 0.0
        %2258 = vmatpush1.msra.mxu0 %v309
        %2259 = vmatprep.subr.mxu0 0.0
        %2260 = vmatpush1.msra.mxu0 %v310
        %2261 = vmatprep.subr.mxu0 0.0
        %2262 = vmatpush1.msra.mxu0 %v311
        %2263 = vmatprep.subr.mxu0 0.0
        %2264 = vmatpush1.msra.mxu0 0.0
        %2265 = vmatprep.subr.mxu0 0.0
        %2266 = vmatpush1.msra.mxu0 0.0
        %2267 = vmatprep.subr.mxu0 0.0
        %2268 = vmatpush1.msra.mxu0 0.0
        %2269 = vmatprep.subr.mxu0 0.0
        %2270 = vmatpush1.msra.mxu0 0.0
        %2271 = vmatprep.subr.mxu0 0.0
        %2272 = vmatpush1.msra.mxu0 0.0
        %2273 = vmatprep.subr.mxu0 0.0
        %2274 = vmatpush1.msra.mxu0 0.0
        %2275 = vmatprep.subr.mxu0 0.0
        %2276 = vmatpush1.msra.mxu0 0.0
        %2277 = vmatprep.subr.mxu0 0.0
        %2278 = vmatpush1.msra.mxu0 0.0
        %2279 = vmatprep.subr.mxu0 0.0
        %2280 = vmatpush1.msra.mxu0 0.0
        %2281 = vmatprep.subr.mxu0 0.0
        %2282 = vmatpush1.msra.mxu0 0.0
        %2283 = vmatprep.subr.mxu0 0.0
        %2284 = vmatpush1.msra.mxu0 0.0
        %2285 = vmatprep.subr.mxu0 0.0
        %2286 = vmatpush1.msra.mxu0 0.0
        %2287 = vmatprep.subr.mxu0 0.0
        %2288 = vmatpush1.msra.mxu0 0.0
        %2289 = vmatprep.subr.mxu0 0.0
        %2290 = vmatpush1.msra.mxu0 0.0
        %2291 = vmatprep.subr.mxu0 0.0
        %2292 = vmatpush1.msra.mxu0 0.0
        %2293 = vmatprep.subr.mxu0 0.0
        %2294 = vmatpush1.msra.mxu0 0.0
        %2295 = vmatprep.mubr.f32.mxu0 0.0
        %2296 = vmatmul.mubr.f32.gmra.mrb[0].mxu0 %v2230
        %v2297 = vpop.f32.mrb[0].mxu0
        %v2298 = vadd.f32 0.0, %v2297
        %v2299 = vpop.f32.mrb[0].mxu0
        %2300 = vdwg.mxu0
        %v2301 = vrcp.pop %v2298
        %v2302 = vmul.f32 %v2230, %v2301
        %v2303 = vmul.f32 %v536, %v2302
        %v2304 = vadd.f32 %v2157, %v2303
        %v2305 = vmul.f32 %v611, %v2010
        %2306 = vmatprep.subr.mxu0 0.0
        %2307 = vmatpush1.msra.mxu0 %v280
        %2308 = vmatprep.subr.mxu0 0.0
        %2309 = vmatpush1.msra.mxu0 %v281
        %2310 = vmatprep.subr.mxu0 0.0
        %2311 = vmatpush1.msra.mxu0 %v282
        %2312 = vmatprep.subr.mxu0 0.0
        %2313 = vmatpush1.msra.mxu0 %v283
        %2314 = vmatprep.subr.mxu0 0.0
        %2315 = vmatpush1.msra.mxu0 %v284
        %2316 = vmatprep.subr.mxu0 0.0
        %2317 = vmatpush1.msra.mxu0 %v285
        %2318 = vmatprep.subr.mxu0 0.0
        %2319 = vmatpush1.msra.mxu0 %v286
        %2320 = vmatprep.subr.mxu0 0.0
        %2321 = vmatpush1.msra.mxu0 %v287
        %2322 = vmatprep.subr.mxu0 0.0
        %2323 = vmatpush1.msra.mxu0 %v288
        %2324 = vmatprep.subr.mxu0 0.0
        %2325 = vmatpush1.msra.mxu0 %v289
        %2326 = vmatprep.subr.mxu0 0.0
        %2327 = vmatpush1.msra.mxu0 %v290
        %2328 = vmatprep.subr.mxu0 0.0
        %2329 = vmatpush1.msra.mxu0 %v291
        %2330 = vmatprep.subr.mxu0 0.0
        %2331 = vmatpush1.msra.mxu0 %v292
        %2332 = vmatprep.subr.mxu0 0.0
        %2333 = vmatpush1.msra.mxu0 %v293
        %2334 = vmatprep.subr.mxu0 0.0
        %2335 = vmatpush1.msra.mxu0 %v294
        %2336 = vmatprep.subr.mxu0 0.0
        %2337 = vmatpush1.msra.mxu0 %v295
        %2338 = vmatprep.subr.mxu0 0.0
        %2339 = vmatpush1.msra.mxu0 0.0
        %2340 = vmatprep.subr.mxu0 0.0
        %2341 = vmatpush1.msra.mxu0 0.0
        %2342 = vmatprep.subr.mxu0 0.0
        %2343 = vmatpush1.msra.mxu0 0.0
        %2344 = vmatprep.subr.mxu0 0.0
        %2345 = vmatpush1.msra.mxu0 0.0
        %2346 = vmatprep.subr.mxu0 0.0
        %2347 = vmatpush1.msra.mxu0 0.0
        %2348 = vmatprep.subr.mxu0 0.0
        %2349 = vmatpush1.msra.mxu0 0.0
        %2350 = vmatprep.subr.mxu0 0.0
        %2351 = vmatpush1.msra.mxu0 0.0
        %2352 = vmatprep.subr.mxu0 0.0
        %2353 = vmatpush1.msra.mxu0 0.0
        %2354 = vmatprep.subr.mxu0 0.0
        %2355 = vmatpush1.msra.mxu0 0.0
        %2356 = vmatprep.subr.mxu0 0.0
        %2357 = vmatpush1.msra.mxu0 0.0
        %2358 = vmatprep.subr.mxu0 0.0
        %2359 = vmatpush1.msra.mxu0 0.0
        %2360 = vmatprep.subr.mxu0 0.0
        %2361 = vmatpush1.msra.mxu0 0.0
        %2362 = vmatprep.subr.mxu0 0.0
        %2363 = vmatpush1.msra.mxu0 0.0
        %2364 = vmatprep.subr.mxu0 0.0
        %2365 = vmatpush1.msra.mxu0 0.0
        %2366 = vmatprep.subr.mxu0 0.0
        %2367 = vmatpush1.msra.mxu0 0.0
        %2368 = vmatprep.subr.mxu0 0.0
        %2369 = vmatpush1.msra.mxu0 0.0
        %2370 = vmatprep.mubr.f32.mxu0 0.0
        %2371 = vmatmul.mubr.f32.gmra.mrb[0].mxu0 %v2305
        %v2372 = vpop.f32.mrb[0].mxu0
        %v2373 = vadd.f32 0.0, %v2372
        %v2374 = vpop.f32.mrb[0].mxu0
        %2375 = vdwg.mxu0
        %v2376 = vmul.f32 %v2373, 1.442695
        %v2377 = vpow.pop %v2376
        %2378 = vmatprep.subr.mxu0 0.0
        %2379 = vmatpush1.msra.mxu0 %v296
        %2380 = vmatprep.subr.mxu0 0.0
        %2381 = vmatpush1.msra.mxu0 %v297
        %2382 = vmatprep.subr.mxu0 0.0
        %2383 = vmatpush1.msra.mxu0 %v298
        %2384 = vmatprep.subr.mxu0 0.0
        %2385 = vmatpush1.msra.mxu0 %v299
        %2386 = vmatprep.subr.mxu0 0.0
        %2387 = vmatpush1.msra.mxu0 %v300
        %2388 = vmatprep.subr.mxu0 0.0
        %2389 = vmatpush1.msra.mxu0 %v301
        %2390 = vmatprep.subr.mxu0 0.0
        %2391 = vmatpush1.msra.mxu0 %v302
        %2392 = vmatprep.subr.mxu0 0.0
        %2393 = vmatpush1.msra.mxu0 %v303
        %2394 = vmatprep.subr.mxu0 0.0
        %2395 = vmatpush1.msra.mxu0 %v304
        %2396 = vmatprep.subr.mxu0 0.0
        %2397 = vmatpush1.msra.mxu0 %v305
        %2398 = vmatprep.subr.mxu0 0.0
        %2399 = vmatpush1.msra.mxu0 %v306
        %2400 = vmatprep.subr.mxu0 0.0
        %2401 = vmatpush1.msra.mxu0 %v307
        %2402 = vmatprep.subr.mxu0 0.0
        %2403 = vmatpush1.msra.mxu0 %v308
        %2404 = vmatprep.subr.mxu0 0.0
        %2405 = vmatpush1.msra.mxu0 %v309
        %2406 = vmatprep.subr.mxu0 0.0
        %2407 = vmatpush1.msra.mxu0 %v310
        %2408 = vmatprep.subr.mxu0 0.0
        %2409 = vmatpush1.msra.mxu0 %v311
        %2410 = vmatprep.subr.mxu0 0.0
        %2411 = vmatpush1.msra.mxu0 0.0
        %2412 = vmatprep.subr.mxu0 0.0
        %2413 = vmatpush1.msra.mxu0 0.0
        %2414 = vmatprep.subr.mxu0 0.0
        %2415 = vmatpush1.msra.mxu0 0.0
        %2416 = vmatprep.subr.mxu0 0.0
        %2417 = vmatpush1.msra.mxu0 0.0
        %2418 = vmatprep.subr.mxu0 0.0
        %2419 = vmatpush1.msra.mxu0 0.0
        %2420 = vmatprep.subr.mxu0 0.0
        %2421 = vmatpush1.msra.mxu0 0.0
        %2422 = vmatprep.subr.mxu0 0.0
        %2423 = vmatpush1.msra.mxu0 0.0
        %2424 = vmatprep.subr.mxu0 0.0
        %2425 = vmatpush1.msra.mxu0 0.0
        %2426 = vmatprep.subr.mxu0 0.0
        %2427 = vmatpush1.msra.mxu0 0.0
        %2428 = vmatprep.subr.mxu0 0.0
        %2429 = vmatpush1.msra.mxu0 0.0
        %2430 = vmatprep.subr.mxu0 0.0
        %2431 = vmatpush1.msra.mxu0 0.0
        %2432 = vmatprep.subr.mxu0 0.0
        %2433 = vmatpush1.msra.mxu0 0.0
        %2434 = vmatprep.subr.mxu0 0.0
        %2435 = vmatpush1.msra.mxu0 0.0
        %2436 = vmatprep.subr.mxu0 0.0
        %2437 = vmatpush1.msra.mxu0 0.0
        %2438 = vmatprep.subr.mxu0 0.0
        %2439 = vmatpush1.msra.mxu0 0.0
        %2440 = vmatprep.subr.mxu0 0.0
        %2441 = vmatpush1.msra.mxu0 0.0
        %2442 = vmatprep.mubr.f32.mxu0 0.0
        %2443 = vmatmul.mubr.f32.gmra.mrb[0].mxu0 %v2377
        %v2444 = vpop.f32.mrb[0].mxu0
        %v2445 = vadd.f32 0.0, %v2444
        %v2446 = vpop.f32.mrb[0].mxu0
        %2447 = vdwg.mxu0
        %v2448 = vrcp.pop %v2445
        %v2449 = vmul.f32 %v2377, %v2448
        %v2450 = vmul.f32 %v611, %v2449
        %v2451 = vadd.f32 %v2304, %v2450
        %v2452 = vmul.f32 %v686, %v2010
        %2453 = vmatprep.subr.mxu0 0.0
        %2454 = vmatpush1.msra.mxu0 %v280
        %2455 = vmatprep.subr.mxu0 0.0
        %2456 = vmatpush1.msra.mxu0 %v281
        %2457 = vmatprep.subr.mxu0 0.0
        %2458 = vmatpush1.msra.mxu0 %v282
        %2459 = vmatprep.subr.mxu0 0.0
        %2460 = vmatpush1.msra.mxu0 %v283
        %2461 = vmatprep.subr.mxu0 0.0
        %2462 = vmatpush1.msra.mxu0 %v284
        %2463 = vmatprep.subr.mxu0 0.0
        %2464 = vmatpush1.msra.mxu0 %v285
        %2465 = vmatprep.subr.mxu0 0.0
        %2466 = vmatpush1.msra.mxu0 %v286
        %2467 = vmatprep.subr.mxu0 0.0
        %2468 = vmatpush1.msra.mxu0 %v287
        %2469 = vmatprep.subr.mxu0 0.0
        %2470 = vmatpush1.msra.mxu0 %v288
        %2471 = vmatprep.subr.mxu0 0.0
        %2472 = vmatpush1.msra.mxu0 %v289
        %2473 = vmatprep.subr.mxu0 0.0
        %2474 = vmatpush1.msra.mxu0 %v290
        %2475 = vmatprep.subr.mxu0 0.0
        %2476 = vmatpush1.msra.mxu0 %v291
        %2477 = vmatprep.subr.mxu0 0.0
        %2478 = vmatpush1.msra.mxu0 %v292
        %2479 = vmatprep.subr.mxu0 0.0
        %2480 = vmatpush1.msra.mxu0 %v293
        %2481 = vmatprep.subr.mxu0 0.0
        %2482 = vmatpush1.msra.mxu0 %v294
        %2483 = vmatprep.subr.mxu0 0.0
        %2484 = vmatpush1.msra.mxu0 %v295
        %2485 = vmatprep.subr.mxu0 0.0
        %2486 = vmatpush1.msra.mxu0 0.0
        %2487 = vmatprep.subr.mxu0 0.0
        %2488 = vmatpush1.msra.mxu0 0.0
        %2489 = vmatprep.subr.mxu0 0.0
        %2490 = vmatpush1.msra.mxu0 0.0
        %2491 = vmatprep.subr.mxu0 0.0
        %2492 = vmatpush1.msra.mxu0 0.0
        %2493 = vmatprep.subr.mxu0 0.0
        %2494 = vmatpush1.msra.mxu0 0.0
        %2495 = vmatprep.subr.mxu0 0.0
        %2496 = vmatpush1.msra.mxu0 0.0
        %2497 = vmatprep.subr.mxu0 0.0
        %2498 = vmatpush1.msra.mxu0 0.0
        %2499 = vmatprep.subr.mxu0 0.0
        %2500 = vmatpush1.msra.mxu0 0.0
        %2501 = vmatprep.subr.mxu0 0.0
        %2502 = vmatpush1.msra.mxu0 0.0
        %2503 = vmatprep.subr.mxu0 0.0
        %2504 = vmatpush1.msra.mxu0 0.0
        %2505 = vmatprep.subr.mxu0 0.0
        %2506 = vmatpush1.msra.mxu0 0.0
        %2507 = vmatprep.subr.mxu0 0.0
        %2508 = vmatpush1.msra.mxu0 0.0
        %2509 = vmatprep.subr.mxu0 0.0
        %2510 = vmatpush1.msra.mxu0 0.0
        %2511 = vmatprep.subr.mxu0 0.0
        %2512 = vmatpush1.msra.mxu0 0.0
        %2513 = vmatprep.subr.mxu0 0.0
        %2514 = vmatpush1.msra.mxu0 0.0
        %2515 = vmatprep.subr.mxu0 0.0
        %2516 = vmatpush1.msra.mxu0 0.0
        %2517 = vmatprep.mubr.f32.mxu0 0.0
        %2518 = vmatmul.mubr.f32.gmra.mrb[0].mxu0 %v2452
        %v2519 = vpop.f32.mrb[0].mxu0
        %v2520 = vadd.f32 0.0, %v2519
        %v2521 = vpop.f32.mrb[0].mxu0
        %2522 = vdwg.mxu0
        %v2523 = vmul.f32 %v2520, 1.442695
        %v2524 = vpow.pop %v2523
        %2525 = vmatprep.subr.mxu0 0.0
        %2526 = vmatpush1.msra.mxu0 %v296
        %2527 = vmatprep.subr.mxu0 0.0
        %2528 = vmatpush1.msra.mxu0 %v297
        %2529 = vmatprep.subr.mxu0 0.0
        %2530 = vmatpush1.msra.mxu0 %v298
        %2531 = vmatprep.subr.mxu0 0.0
        %2532 = vmatpush1.msra.mxu0 %v299
        %2533 = vmatprep.subr.mxu0 0.0
        %2534 = vmatpush1.msra.mxu0 %v300
        %2535 = vmatprep.subr.mxu0 0.0
        %2536 = vmatpush1.msra.mxu0 %v301
        %2537 = vmatprep.subr.mxu0 0.0
        %2538 = vmatpush1.msra.mxu0 %v302
        %2539 = vmatprep.subr.mxu0 0.0
        %2540 = vmatpush1.msra.mxu0 %v303
        %2541 = vmatprep.subr.mxu0 0.0
        %2542 = vmatpush1.msra.mxu0 %v304
        %2543 = vmatprep.subr.mxu0 0.0
        %2544 = vmatpush1.msra.mxu0 %v305
        %2545 = vmatprep.subr.mxu0 0.0
        %2546 = vmatpush1.msra.mxu0 %v306
        %2547 = vmatprep.subr.mxu0 0.0
        %2548 = vmatpush1.msra.mxu0 %v307
        %2549 = vmatprep.subr.mxu0 0.0
        %2550 = vmatpush1.msra.mxu0 %v308
        %2551 = vmatprep.subr.mxu0 0.0
        %2552 = vmatpush1.msra.mxu0 %v309
        %2553 = vmatprep.subr.mxu0 0.0
        %2554 = vmatpush1.msra.mxu0 %v310
        %2555 = vmatprep.subr.mxu0 0.0
        %2556 = vmatpush1.msra.mxu0 %v311
        %2557 = vmatprep.subr.mxu0 0.0
        %2558 = vmatpush1.msra.mxu0 0.0
        %2559 = vmatprep.subr.mxu0 0.0
        %2560 = vmatpush1.msra.mxu0 0.0
        %2561 = vmatprep.subr.mxu0 0.0
        %2562 = vmatpush1.msra.mxu0 0.0
        %2563 = vmatprep.subr.mxu0 0.0
        %2564 = vmatpush1.msra.mxu0 0.0
        %2565 = vmatprep.subr.mxu0 0.0
        %2566 = vmatpush1.msra.mxu0 0.0
        %2567 = vmatprep.subr.mxu0 0.0
        %2568 = vmatpush1.msra.mxu0 0.0
        %2569 = vmatprep.subr.mxu0 0.0
        %2570 = vmatpush1.msra.mxu0 0.0
        %2571 = vmatprep.subr.mxu0 0.0
        %2572 = vmatpush1.msra.mxu0 0.0
        %2573 = vmatprep.subr.mxu0 0.0
        %2574 = vmatpush1.msra.mxu0 0.0
        %2575 = vmatprep.subr.mxu0 0.0
        %2576 = vmatpush1.msra.mxu0 0.0
        %2577 = vmatprep.subr.mxu0 0.0
        %2578 = vmatpush1.msra.mxu0 0.0
        %2579 = vmatprep.subr.mxu0 0.0
        %2580 = vmatpush1.msra.mxu0 0.0
        %2581 = vmatprep.subr.mxu0 0.0
        %2582 = vmatpush1.msra.mxu0 0.0
        %2583 = vmatprep.subr.mxu0 0.0
        %2584 = vmatpush1.msra.mxu0 0.0
        %2585 = vmatprep.subr.mxu0 0.0
        %2586 = vmatpush1.msra.mxu0 0.0
        %2587 = vmatprep.subr.mxu0 0.0
        %2588 = vmatpush1.msra.mxu0 0.0
        %2589 = vmatprep.mubr.f32.mxu0 0.0
        %2590 = vmatmul.mubr.f32.gmra.mrb[0].mxu0 %v2524
        %v2591 = vpop.f32.mrb[0].mxu0
        %v2592 = vadd.f32 0.0, %v2591
        %v2593 = vpop.f32.mrb[0].mxu0
        %2594 = vdwg.mxu0
        %v2595 = vrcp.pop %v2592
        %v2596 = vmul.f32 %v2524, %v2595
        %v2597 = vmul.f32 %v686, %v2596
        %v2598 = vadd.f32 %v2451, %v2597
        %2599 = vst [vmem:[%s279] sm:$0xff] %v2598
        %s2600 = sand.u32 %s127, 1
        %s2601 = scalar_lea.sflag [#allocation4], %s2600
        %s2602 = sand.u32 %s127, 1
        %s2603 = smul.addr %s2602, 8
        %s2604 = scalar_lea.vmem [#allocation10], %s2603
        // Predicated region
        $region53: #{tpu_custom_call.1} parent=35 // pred_check
          %p2605 = pneg %p137
        $region54: #{tpu_custom_call.1} parent=35 // pred_check_branch
          %2607 = sbr.rel (%p2605) target = $region56
        $region55: #{tpu_custom_call.1} parent=35 // pred_region
          %s2609 = ssub.s32 128, 128
          %2610 = vsyncadd %s2601, %s2609
          %s2611 = smul.addr %s25, 128
          %s2612 = scalar_lea.hbm %s4, %s2611
          %s2614 = sshll.u32 %s2604, 4
          %s2615 = int_to_ptr.vmem [resolvable:$true] %s2614
          %2617 = dma.vmem_to_hbm [thread:$0]  %s2615, 128, %s2612, %s2601
        $region56: #{tpu_custom_call.1} parent=35 // pred_fallthru
          _
      $region36: #{tpu_custom_call.1} parent=5 // pred_fallthru
        _
      %p2618 = scmp.le.s32.totalorder 2, %s20
      // Predicated region
      $region57: #{tpu_custom_call.1} parent=5 // pred_check
        %p2619 = pneg %p2618
      $region58: #{tpu_custom_call.1} parent=5 // pred_check_branch
        %2621 = sbr.rel (%p2619) target = $region60
      $region59: #{tpu_custom_call.1} parent=5 // pred_region
        %s2622 = ssub.s32 %s20, 2
        // Predicated region
        $region61: #{tpu_custom_call.1} parent=59 // pred_check
          %p2623 = pneg %p143
        $region62: #{tpu_custom_call.1} parent=59 // pred_check_branch
          %2625 = sbr.rel (%p2623) target = $region64
        $region63: #{tpu_custom_call.1} parent=59 // pred_region
          %s2626 = sand.u32 %s128, 1
          %s2627 = scalar_lea.sflag [#allocation4], %s2626
          %s2628 = sand.u32 %s128, 1
          %s2629 = smul.addr %s2628, 8
          %s2630 = scalar_lea.vmem [#allocation10], %s2629
          %2631 = dma.done %s2627, 128
        $region64: #{tpu_custom_call.1} parent=59 // pred_fallthru
          _
      $region60: #{tpu_custom_call.1} parent=5 // pred_fallthru
        _
    $region6: #{tpu_custom_call.1} parent=1 // loop_footer
      %s24 = sadd.s32 1, %s20
    $region7: #{tpu_custom_call.1} parent=1 // loop_footer_branch
      %19 = sbr.rel target = $region3
    $region8: #{tpu_custom_call.1} parent=1 // loop_exit
      _
    %2632 = vsyncpa [#allocation3], 1
    %s2633 = scalar_lea.sflag [#allocation3], 1
    %2634 = vsyncpa %s2633, 1
    %2635 = vsyncpa [#allocation6], 1
    %s2636 = scalar_lea.sflag [#allocation6], 1
    %2637 = vsyncpa %s2636, 1
    %2638 = vsyncpa [#allocation9], 1
    %2639 = vsyncpa [#allocation4], 1
    %s2640 = scalar_lea.sflag [#allocation4], 1
    %2641 = vsyncpa %s2640, 1

</llo_original>
